<compile_context>
chip_gen: v6e
topology: v6e:2x2x1
jax: 0.10.0
libtpu: 0.0.40
codegen_flags: <defaults>
</compile_context>

<pallas_src>
import math

import jax
import jax.numpy as jnp
from jax.experimental import pallas as pl
from jax.experimental.pallas import tpu as pltpu


def _gelu_exact(x):
    # Matches torch.nn.functional.gelu default (exact, erf-based) on float32.
    return 0.5 * x * (1.0 + jax.lax.erf(x * (1.0 / math.sqrt(2.0))))


def _ladder_fused_kernel(pt_ref, eps_ref, wct_ref, bc_ref, wlr_ref, bl_ref,
                         wcm_ref, wce_ref, bcat_ref, out_ref):
    """One grid step == one batch element. Everything stays in VMEM."""
    # ---- Stage 1: 5x5 valid conv as matmul, transposed so the 144 spatial
    #      positions sit on the lane axis:  (z,100) @ (100,144) -> (z,144).
    h = jnp.dot(wct_ref[...], pt_ref[0],
                preferred_element_type=jnp.float32) + bc_ref[...]      # (z,144)
    h = _gelu_exact(h)

    # ---- Stage 2: mean_linear.  torch flattens the conv output channel-major
    #      ((z,12,12) -> z*144), so conv channel zc owns the contiguous
    #      (144, z) block wlr[zc] of w_lin.  Consume h row-by-row: z small
    #      matmuls, no transpose / reshape of h needed.
    nz = wlr_ref.shape[0]
    mean = bl_ref[...]                                                 # (1, z)
    for zc in range(nz):                                               # static, unrolled
        mean = mean + jnp.dot(h[zc:zc + 1, :], wlr_ref[zc],
                              preferred_element_type=jnp.float32)

    # ---- Stage 3: cat_op with w_cat pre-split into mean/eps halves
    #      (equivalent to cat((mean, eps), dim=1) @ w_cat), then exact GELU.
    out = (jnp.dot(mean, wcm_ref[...], preferred_element_type=jnp.float32)
           + jnp.dot(eps_ref[0], wce_ref[...], preferred_element_type=jnp.float32)
           + bcat_ref[...])                                            # (1, z)
    out_ref[0] = _gelu_exact(out).astype(out_ref.dtype)


def ladder_stochastic_forward(x, params, eps):
    """Forward pass of LadderStochastic (use_bn=False).

    x:   (B, C, 16, 16)  NCHW float32
    eps: (B, z)          the squeezed version of torch.randn(B, z, 1, 1)
    returns (B, z) float32
    NOTE: requires B > 1 so that torch's `.squeeze()` only removes the
    trailing singleton spatial dims (as in the reference module).
    """
    B, C, H, W = x.shape
    KH = KW = 5
    OH, OW = H - KH + 1, W - KW + 1          # 12, 12
    S = OH * OW                              # 144
    K = C * KH * KW                          # 100
    z = params["b_conv"].shape[0]

    # ---- im2col (XLA glue), built directly in the transposed (K, S) layout the
    #      kernel consumes:  patches_t[b, c*25+kh*5+kw, oh*12+ow] = x[b,c,oh+kh,ow+kw]
    patches_t = jnp.stack(
        [x[:, :, kh:kh + OH, kw:kw + OW] for kh in range(KH) for kw in range(KW)],
        axis=2,                              # (B, C, 25, OH, OW)
    ).reshape(B, K, S)                       # (B, 100, 144)

    # ---- trace-time weight re-layout (tiny, one-off)
    wct = params["w_conv"].reshape(z, K)          # (z, 100)
    bc = params["b_conv"].reshape(z, 1)           # (z, 1)   broadcasts over lanes
    wlr = params["w_lin"].reshape(z, S, z)        # (z, 144, z) channel-major blocks
    bl = params["b_lin"].reshape(1, z)
    wcm = params["w_cat"][:z, :]                  # (z, z)  acts on mean half of cat
    wce = params["w_cat"][z:, :]                  # (z, z)  acts on eps  half of cat
    bcat = params["b_cat"].reshape(1, z)
    eps3 = eps.reshape(B, 1, z)

    out = pl.pallas_call(
        _ladder_fused_kernel,
        out_shape=jax.ShapeDtypeStruct((B, 1, z), jnp.float32),
        grid=(B,),
        in_specs=[
            pl.BlockSpec((1, K, S), lambda b: (b, 0, 0)),   # patches_t (per batch)
            pl.BlockSpec((1, 1, z), lambda b: (b, 0, 0)),   # eps       (per batch)
            pl.BlockSpec((z, K), lambda b: (0, 0)),          # conv weight (resident)
            pl.BlockSpec((z, 1), lambda b: (0, 0)),          # conv bias
            pl.BlockSpec((z, S, z), lambda b: (0, 0, 0)),    # w_lin blocks
            pl.BlockSpec((1, z), lambda b: (0, 0)),          # b_lin
            pl.BlockSpec((z, z), lambda b: (0, 0)),          # w_cat (mean half)
            pl.BlockSpec((z, z), lambda b: (0, 0)),          # w_cat (eps half)
            pl.BlockSpec((1, z), lambda b: (0, 0)),          # b_cat
        ],
        out_specs=pl.BlockSpec((1, 1, z), lambda b: (b, 0, 0)),
        compiler_params=pltpu.CompilerParams(
            dimension_semantics=("parallel",),               # v7x: shard batch over 2 TCs
            vmem_limit_bytes=32 * 1024 * 1024,
        ),
    )(patches_t, eps3, wct, bc, wlr, bl, wcm, wce, bcat)
    return out.reshape(B, z)


if __name__ == "__main__":
    B, C, Hs, Ws, z = 2, 4, 16, 16, 8

    key = jax.random.PRNGKey(0)
    ks = jax.random.split(key, 8)

    x = jax.random.normal(ks[0], (B, C, Hs, Ws), jnp.float32)
    # eps is torch.randn(mean.shape) with mean shape (B, z, 1, 1); we keep the
    # squeezed (B, z) form since the trailing dims are singletons.
    eps = jax.random.normal(ks[1], (B, z), jnp.float32)

    def _uniform_init(k, shape, fan_in):
        bound = 1.0 / math.sqrt(fan_in)
        return jax.random.uniform(k, shape, jnp.float32, -bound, bound)

    params = {
        # nn.Conv2d(feature_dim, z_dim, kernel_size=5): weight (z, C, 5, 5), bias (z,)
        "w_conv": _uniform_init(ks[2], (z, C, 5, 5), C * 25),
        "b_conv": _uniform_init(ks[3], (z,), C * 25),
        # nn.Linear(z*12*12, z), stored here as (in, out)
        "w_lin": _uniform_init(ks[4], (z * 12 * 12, z), z * 12 * 12),
        "b_lin": _uniform_init(ks[5], (z,), z * 12 * 12),
        # nn.Linear(2*z, z), stored here as (in, out)
        "w_cat": _uniform_init(ks[6], (2 * z, z), 2 * z),
        "b_cat": _uniform_init(ks[7], (z,), 2 * z),
    }

    out = jax.jit(ladder_stochastic_forward)(x, params, eps)
    out = jax.block_until_ready(out)
    assert out.shape == (B, z) and out.dtype == jnp.float32

    print("KERNEL_OK")
</pallas_src>

<mosaic_0001>
module attributes {stable_mosaic.version = 11 : i64} {
  func.func @_ladder_fused_kernel(%arg0: i32, %arg1: memref<1x100x144xf32, #tpu.memory_space<vmem>>, %arg2: memref<1x1x8xf32, #tpu.memory_space<vmem>>, %arg3: memref<8x100xf32, #tpu.memory_space<vmem>>, %arg4: memref<8x1xf32, #tpu.memory_space<vmem>>, %arg5: memref<8x144x8xf32, #tpu.memory_space<vmem>>, %arg6: memref<1x8xf32, #tpu.memory_space<vmem>>, %arg7: memref<8x8xf32, #tpu.memory_space<vmem>>, %arg8: memref<8x8xf32, #tpu.memory_space<vmem>>, %arg9: memref<1x8xf32, #tpu.memory_space<vmem>>, %arg10: memref<1x1x8xf32, #tpu.memory_space<vmem>>) attributes {dimension_semantics = [#tpu.dimension_semantics<parallel>], iteration_bounds = array<i64: 2>, scalar_prefetch = 0 : i64, scratch_operands = 0 : i64, tpu.core_type = #tpu.core_type<tc>, window_params = [{transform_indices = @transform_0, window_bounds = array<i64: 1, 100, 144>}, {transform_indices = @transform_1, window_bounds = array<i64: 1, 1, 8>}, {pipeline_mode = #tpu.pipeline_mode<synchronous>, transform_indices = @transform_2, window_bounds = array<i64: 8, 100>}, {pipeline_mode = #tpu.pipeline_mode<synchronous>, transform_indices = @transform_3, window_bounds = array<i64: 8, 1>}, {pipeline_mode = #tpu.pipeline_mode<synchronous>, transform_indices = @transform_4, window_bounds = array<i64: 8, 144, 8>}, {pipeline_mode = #tpu.pipeline_mode<synchronous>, transform_indices = @transform_5, window_bounds = array<i64: 1, 8>}, {pipeline_mode = #tpu.pipeline_mode<synchronous>, transform_indices = @transform_6, window_bounds = array<i64: 8, 8>}, {pipeline_mode = #tpu.pipeline_mode<synchronous>, transform_indices = @transform_7, window_bounds = array<i64: 8, 8>}, {pipeline_mode = #tpu.pipeline_mode<synchronous>, transform_indices = @transform_8, window_bounds = array<i64: 1, 8>}, {transform_indices = @transform_9, window_bounds = array<i64: 1, 1, 8>}]} {
    %c0 = arith.constant 0 : index
    %c0_0 = arith.constant 0 : index
    %0 = vector.load %arg3[%c0, %c0_0] : memref<8x100xf32, #tpu.memory_space<vmem>>, vector<8x100xf32>
    %c0_1 = arith.constant 0 : index
    %c0_2 = arith.constant 0 : index
    %c0_3 = arith.constant 0 : index
    %1 = vector.load %arg1[%c0_1, %c0_2, %c0_3] : memref<1x100x144xf32, #tpu.memory_space<vmem>>, vector<1x100x144xf32>
    %2 = vector.shape_cast %1 : vector<1x100x144xf32> to vector<100x144xf32>
    %cst = arith.constant dense<0.000000e+00> : vector<8x144xf32>
    %3 = tpu.matmul %0, %2, %cst {dimension_numbers = #tpu.dot_dimension_numbers<[1], [0], [0], [1], [0, 0, 1, 1], [], []>} : vector<8x100xf32>, vector<100x144xf32>, vector<8x144xf32> -> vector<8x144xf32>
    %c0_4 = arith.constant 0 : index
    %c0_5 = arith.constant 0 : index
    %4 = vector.load %arg4[%c0_4, %c0_5] : memref<8x1xf32, #tpu.memory_space<vmem>>, vector<8x1xf32>
    %5 = vector.broadcast %4 : vector<8x1xf32> to vector<8x144xf32>
    %6 = arith.addf %3, %5 : vector<8x144xf32>
    %cst_6 = arith.constant 5.000000e-01 : f32
    %7 = vector.broadcast %cst_6 : f32 to vector<8x144xf32>
    %8 = arith.mulf %7, %6 : vector<8x144xf32>
    %cst_7 = arith.constant 0.707106769 : f32
    %9 = vector.broadcast %cst_7 : f32 to vector<8x144xf32>
    %10 = arith.mulf %6, %9 : vector<8x144xf32>
    %11 = math.erf %10 : vector<8x144xf32>
    %cst_8 = arith.constant 1.000000e+00 : f32
    %12 = vector.broadcast %cst_8 : f32 to vector<8x144xf32>
    %13 = arith.addf %12, %11 : vector<8x144xf32>
    %14 = arith.mulf %8, %13 : vector<8x144xf32>
    %c0_9 = arith.constant 0 : index
    %c0_10 = arith.constant 0 : index
    %15 = vector.load %arg6[%c0_9, %c0_10] : memref<1x8xf32, #tpu.memory_space<vmem>>, vector<1x8xf32>
    %16 = vector.extract_strided_slice %14 {offsets = [0, 0], sizes = [1, 144], strides = [1, 1]} : vector<8x144xf32> to vector<1x144xf32>
    %c0_11 = arith.constant 0 : index
    %c0_12 = arith.constant 0 : index
    %c0_13 = arith.constant 0 : index
    %17 = vector.load %arg5[%c0_11, %c0_12, %c0_13] : memref<8x144x8xf32, #tpu.memory_space<vmem>>, vector<1x144x8xf32>
    %18 = vector.shape_cast %17 : vector<1x144x8xf32> to vector<144x8xf32>
    %cst_14 = arith.constant dense<0.000000e+00> : vector<1x8xf32>
    %19 = tpu.matmul %16, %18, %cst_14 {dimension_numbers = #tpu.dot_dimension_numbers<[1], [0], [0], [1], [0, 0, 1, 1], [], []>} : vector<1x144xf32>, vector<144x8xf32>, vector<1x8xf32> -> vector<1x8xf32>
    %20 = arith.addf %15, %19 : vector<1x8xf32>
    %21 = vector.extract_strided_slice %14 {offsets = [1, 0], sizes = [1, 144], strides = [1, 1]} : vector<8x144xf32> to vector<1x144xf32>
    %c1 = arith.constant 1 : index
    %c0_15 = arith.constant 0 : index
    %c0_16 = arith.constant 0 : index
    %22 = vector.load %arg5[%c1, %c0_15, %c0_16] : memref<8x144x8xf32, #tpu.memory_space<vmem>>, vector<1x144x8xf32>
    %23 = vector.shape_cast %22 : vector<1x144x8xf32> to vector<144x8xf32>
    %cst_17 = arith.constant dense<0.000000e+00> : vector<1x8xf32>
    %24 = tpu.matmul %21, %23, %cst_17 {dimension_numbers = #tpu.dot_dimension_numbers<[1], [0], [0], [1], [0, 0, 1, 1], [], []>} : vector<1x144xf32>, vector<144x8xf32>, vector<1x8xf32> -> vector<1x8xf32>
    %25 = arith.addf %20, %24 : vector<1x8xf32>
    %26 = vector.extract_strided_slice %14 {offsets = [2, 0], sizes = [1, 144], strides = [1, 1]} : vector<8x144xf32> to vector<1x144xf32>
    %c2 = arith.constant 2 : index
    %c0_18 = arith.constant 0 : index
    %c0_19 = arith.constant 0 : index
    %27 = vector.load %arg5[%c2, %c0_18, %c0_19] : memref<8x144x8xf32, #tpu.memory_space<vmem>>, vector<1x144x8xf32>
    %28 = vector.shape_cast %27 : vector<1x144x8xf32> to vector<144x8xf32>
    %cst_20 = arith.constant dense<0.000000e+00> : vector<1x8xf32>
    %29 = tpu.matmul %26, %28, %cst_20 {dimension_numbers = #tpu.dot_dimension_numbers<[1], [0], [0], [1], [0, 0, 1, 1], [], []>} : vector<1x144xf32>, vector<144x8xf32>, vector<1x8xf32> -> vector<1x8xf32>
    %30 = arith.addf %25, %29 : vector<1x8xf32>
    %31 = vector.extract_strided_slice %14 {offsets = [3, 0], sizes = [1, 144], strides = [1, 1]} : vector<8x144xf32> to vector<1x144xf32>
    %c3 = arith.constant 3 : index
    %c0_21 = arith.constant 0 : index
    %c0_22 = arith.constant 0 : index
    %32 = vector.load %arg5[%c3, %c0_21, %c0_22] : memref<8x144x8xf32, #tpu.memory_space<vmem>>, vector<1x144x8xf32>
    %33 = vector.shape_cast %32 : vector<1x144x8xf32> to vector<144x8xf32>
    %cst_23 = arith.constant dense<0.000000e+00> : vector<1x8xf32>
    %34 = tpu.matmul %31, %33, %cst_23 {dimension_numbers = #tpu.dot_dimension_numbers<[1], [0], [0], [1], [0, 0, 1, 1], [], []>} : vector<1x144xf32>, vector<144x8xf32>, vector<1x8xf32> -> vector<1x8xf32>
    %35 = arith.addf %30, %34 : vector<1x8xf32>
    %36 = vector.extract_strided_slice %14 {offsets = [4, 0], sizes = [1, 144], strides = [1, 1]} : vector<8x144xf32> to vector<1x144xf32>
    %c4 = arith.constant 4 : index
    %c0_24 = arith.constant 0 : index
    %c0_25 = arith.constant 0 : index
    %37 = vector.load %arg5[%c4, %c0_24, %c0_25] : memref<8x144x8xf32, #tpu.memory_space<vmem>>, vector<1x144x8xf32>
    %38 = vector.shape_cast %37 : vector<1x144x8xf32> to vector<144x8xf32>
    %cst_26 = arith.constant dense<0.000000e+00> : vector<1x8xf32>
    %39 = tpu.matmul %36, %38, %cst_26 {dimension_numbers = #tpu.dot_dimension_numbers<[1], [0], [0], [1], [0, 0, 1, 1], [], []>} : vector<1x144xf32>, vector<144x8xf32>, vector<1x8xf32> -> vector<1x8xf32>
    %40 = arith.addf %35, %39 : vector<1x8xf32>
    %41 = vector.extract_strided_slice %14 {offsets = [5, 0], sizes = [1, 144], strides = [1, 1]} : vector<8x144xf32> to vector<1x144xf32>
    %c5 = arith.constant 5 : index
    %c0_27 = arith.constant 0 : index
    %c0_28 = arith.constant 0 : index
    %42 = vector.load %arg5[%c5, %c0_27, %c0_28] : memref<8x144x8xf32, #tpu.memory_space<vmem>>, vector<1x144x8xf32>
    %43 = vector.shape_cast %42 : vector<1x144x8xf32> to vector<144x8xf32>
    %cst_29 = arith.constant dense<0.000000e+00> : vector<1x8xf32>
    %44 = tpu.matmul %41, %43, %cst_29 {dimension_numbers = #tpu.dot_dimension_numbers<[1], [0], [0], [1], [0, 0, 1, 1], [], []>} : vector<1x144xf32>, vector<144x8xf32>, vector<1x8xf32> -> vector<1x8xf32>
    %45 = arith.addf %40, %44 : vector<1x8xf32>
    %46 = vector.extract_strided_slice %14 {offsets = [6, 0], sizes = [1, 144], strides = [1, 1]} : vector<8x144xf32> to vector<1x144xf32>
    %c6 = arith.constant 6 : index
    %c0_30 = arith.constant 0 : index
    %c0_31 = arith.constant 0 : index
    %47 = vector.load %arg5[%c6, %c0_30, %c0_31] : memref<8x144x8xf32, #tpu.memory_space<vmem>>, vector<1x144x8xf32>
    %48 = vector.shape_cast %47 : vector<1x144x8xf32> to vector<144x8xf32>
    %cst_32 = arith.constant dense<0.000000e+00> : vector<1x8xf32>
    %49 = tpu.matmul %46, %48, %cst_32 {dimension_numbers = #tpu.dot_dimension_numbers<[1], [0], [0], [1], [0, 0, 1, 1], [], []>} : vector<1x144xf32>, vector<144x8xf32>, vector<1x8xf32> -> vector<1x8xf32>
    %50 = arith.addf %45, %49 : vector<1x8xf32>
    %51 = vector.extract_strided_slice %14 {offsets = [7, 0], sizes = [1, 144], strides = [1, 1]} : vector<8x144xf32> to vector<1x144xf32>
    %c7 = arith.constant 7 : index
    %c0_33 = arith.constant 0 : index
    %c0_34 = arith.constant 0 : index
    %52 = vector.load %arg5[%c7, %c0_33, %c0_34] : memref<8x144x8xf32, #tpu.memory_space<vmem>>, vector<1x144x8xf32>
    %53 = vector.shape_cast %52 : vector<1x144x8xf32> to vector<144x8xf32>
    %cst_35 = arith.constant dense<0.000000e+00> : vector<1x8xf32>
    %54 = tpu.matmul %51, %53, %cst_35 {dimension_numbers = #tpu.dot_dimension_numbers<[1], [0], [0], [1], [0, 0, 1, 1], [], []>} : vector<1x144xf32>, vector<144x8xf32>, vector<1x8xf32> -> vector<1x8xf32>
    %55 = arith.addf %50, %54 : vector<1x8xf32>
    %c0_36 = arith.constant 0 : index
    %c0_37 = arith.constant 0 : index
    %56 = vector.load %arg7[%c0_36, %c0_37] : memref<8x8xf32, #tpu.memory_space<vmem>>, vector<8x8xf32>
    %cst_38 = arith.constant dense<0.000000e+00> : vector<1x8xf32>
    %57 = tpu.matmul %55, %56, %cst_38 {dimension_numbers = #tpu.dot_dimension_numbers<[1], [0], [0], [1], [0, 0, 1, 1], [], []>} : vector<1x8xf32>, vector<8x8xf32>, vector<1x8xf32> -> vector<1x8xf32>
    %c0_39 = arith.constant 0 : index
    %c0_40 = arith.constant 0 : index
    %c0_41 = arith.constant 0 : index
    %58 = vector.load %arg2[%c0_39, %c0_40, %c0_41] : memref<1x1x8xf32, #tpu.memory_space<vmem>>, vector<1x1x8xf32>
    %59 = vector.shape_cast %58 : vector<1x1x8xf32> to vector<1x8xf32>
    %c0_42 = arith.constant 0 : index
    %c0_43 = arith.constant 0 : index
    %60 = vector.load %arg8[%c0_42, %c0_43] : memref<8x8xf32, #tpu.memory_space<vmem>>, vector<8x8xf32>
    %cst_44 = arith.constant dense<0.000000e+00> : vector<1x8xf32>
    %61 = tpu.matmul %59, %60, %cst_44 {dimension_numbers = #tpu.dot_dimension_numbers<[1], [0], [0], [1], [0, 0, 1, 1], [], []>} : vector<1x8xf32>, vector<8x8xf32>, vector<1x8xf32> -> vector<1x8xf32>
    %62 = arith.addf %57, %61 : vector<1x8xf32>
    %c0_45 = arith.constant 0 : index
    %c0_46 = arith.constant 0 : index
    %63 = vector.load %arg9[%c0_45, %c0_46] : memref<1x8xf32, #tpu.memory_space<vmem>>, vector<1x8xf32>
    %64 = arith.addf %62, %63 : vector<1x8xf32>
    %cst_47 = arith.constant 5.000000e-01 : f32
    %65 = vector.broadcast %cst_47 : f32 to vector<1x8xf32>
    %66 = arith.mulf %65, %64 : vector<1x8xf32>
    %cst_48 = arith.constant 0.707106769 : f32
    %67 = vector.broadcast %cst_48 : f32 to vector<1x8xf32>
    %68 = arith.mulf %64, %67 : vector<1x8xf32>
    %69 = math.erf %68 : vector<1x8xf32>
    %cst_49 = arith.constant 1.000000e+00 : f32
    %70 = vector.broadcast %cst_49 : f32 to vector<1x8xf32>
    %71 = arith.addf %70, %69 : vector<1x8xf32>
    %72 = arith.mulf %66, %71 : vector<1x8xf32>
    %c0_50 = arith.constant 0 : index
    %c0_51 = arith.constant 0 : index
    %c0_52 = arith.constant 0 : index
    %73 = vector.load %arg10[%c0_50, %c0_51, %c0_52] : memref<1x1x8xf32, #tpu.memory_space<vmem>>, vector<1x1x8xf32>
    %74 = vector.shape_cast %73 : vector<1x1x8xf32> to vector<1x8xf32>
    %75 = vector.shape_cast %72 : vector<1x8xf32> to vector<1x1x8xf32>
    tpu.vector_store %arg10[%c0_50, %c0_51, %c0_52], %75 {strides = array<i32>} : memref<1x1x8xf32, #tpu.memory_space<vmem>>, vector<1x1x8xf32>,
    return
  }
  func.func @transform_0(%arg0: i32) -> (i32, i32, i32) {
    %c0_i32 = arith.constant 0 : i32
    %c0_i32_0 = arith.constant 0 : i32
    %c0_i32_1 = arith.constant 0 : i32
    return %arg0, %c0_i32, %c0_i32_0 : i32, i32, i32
  }
  func.func @transform_1(%arg0: i32) -> (i32, i32, i32) {
    %c0_i32 = arith.constant 0 : i32
    %c0_i32_0 = arith.constant 0 : i32
    %c0_i32_1 = arith.constant 0 : i32
    return %arg0, %c0_i32, %c0_i32_0 : i32, i32, i32
  }
  func.func @transform_2(%arg0: i32) -> (i32, i32) {
    %c0_i32 = arith.constant 0 : i32
    %c0_i32_0 = arith.constant 0 : i32
    %c0_i32_1 = arith.constant 0 : i32
    return %c0_i32, %c0_i32_0 : i32, i32
  }
  func.func @transform_3(%arg0: i32) -> (i32, i32) {
    %c0_i32 = arith.constant 0 : i32
    %c0_i32_0 = arith.constant 0 : i32
    %c0_i32_1 = arith.constant 0 : i32
    return %c0_i32, %c0_i32_0 : i32, i32
  }
  func.func @transform_4(%arg0: i32) -> (i32, i32, i32) {
    %c0_i32 = arith.constant 0 : i32
    %c0_i32_0 = arith.constant 0 : i32
    %c0_i32_1 = arith.constant 0 : i32
    %c0_i32_2 = arith.constant 0 : i32
    return %c0_i32, %c0_i32_0, %c0_i32_1 : i32, i32, i32
  }
  func.func @transform_5(%arg0: i32) -> (i32, i32) {
    %c0_i32 = arith.constant 0 : i32
    %c0_i32_0 = arith.constant 0 : i32
    %c0_i32_1 = arith.constant 0 : i32
    return %c0_i32, %c0_i32_0 : i32, i32
  }
  func.func @transform_6(%arg0: i32) -> (i32, i32) {
    %c0_i32 = arith.constant 0 : i32
    %c0_i32_0 = arith.constant 0 : i32
    %c0_i32_1 = arith.constant 0 : i32
    return %c0_i32, %c0_i32_0 : i32, i32
  }
  func.func @transform_7(%arg0: i32) -> (i32, i32) {
    %c0_i32 = arith.constant 0 : i32
    %c0_i32_0 = arith.constant 0 : i32
    %c0_i32_1 = arith.constant 0 : i32
    return %c0_i32, %c0_i32_0 : i32, i32
  }
  func.func @transform_8(%arg0: i32) -> (i32, i32) {
    %c0_i32 = arith.constant 0 : i32
    %c0_i32_0 = arith.constant 0 : i32
    %c0_i32_1 = arith.constant 0 : i32
    return %c0_i32, %c0_i32_0 : i32, i32
  }
  func.func @transform_9(%arg0: i32) -> (i32, i32, i32) {
    %c0_i32 = arith.constant 0 : i32
    %c0_i32_0 = arith.constant 0 : i32
    %c0_i32_1 = arith.constant 0 : i32
    return %arg0, %c0_i32, %c0_i32_0 : i32, i32, i32
  }
}

</mosaic_0001>

<llo_original>
// kernel: ladder_stochastic_forward.1
$region0: #{ladder_stochastic_forward.1}
  #allocation0 [shape = 'u32[]', space=smem, size = 0x4, offset = 0x4, fixed_abs, tag = 'smem constant byte address 0x4 - core index']
  #allocation1 [shape = 'u32[144,128]{1,0:T(1,128)}', space=vmem, size = 0x12000, scoped, tag = 'internal scratch']
  %s0 = inlined_call_operand.vmem [shape: f32[2,100,144], index: 0, kind: input, shape index: {}]
  %s1 = inlined_call_operand.vmem [shape: f32[2,1,8], index: 1, kind: input, shape index: {}]
  %s2 = inlined_call_operand.vmem [shape: f32[8,100], index: 2, kind: input, shape index: {}]
  %s3 = inlined_call_operand.vmem [shape: f32[8,1], index: 3, kind: input, shape index: {}]
  %s4 = inlined_call_operand.vmem [shape: f32[8,144,8], index: 4, kind: input, shape index: {}]
  %s5 = inlined_call_operand.vmem [shape: f32[1,8], index: 5, kind: input, shape index: {}]
  %s6 = inlined_call_operand.vmem [shape: f32[8,8], index: 6, kind: input, shape index: {}]
  %s7 = inlined_call_operand.vmem [shape: f32[8,8], index: 7, kind: input, shape index: {}]
  %s8 = inlined_call_operand.vmem [shape: f32[1,8], index: 8, kind: input, shape index: {}]
  %s9 = inlined_call_operand.hbm [shape: f32[2,1,8], index: 9, kind: output, shape index: {}]
  %s10 = sld [smem:[#allocation0]]
  $region69: #{ladder_stochastic_forward.1} parent=0
    _
  %s12 = ssub.s32 1, %s10
  %s13 = scalar_select 0, %s12, %s10
  $region1: #{ladder_stochastic_forward.1} parent=0
    #allocation2 [shape = 'u8[1024]{0}', space=vmem, size = 0x400, scoped, tag = 'output window, operand 0']
    #allocation3 [shape = 's32[2]{0}', space=sflag, size = 0x8, scoped, tag = 'scoped memory for ladder_stochastic_forward.1']
    %14 = vsyncpa [#allocation3], 0
    %s15 = scalar_lea.sflag [#allocation3], 1
    %16 = vsyncpa %s15, 0
    loop: start=0, step=1, limit=4
    $region2: #{ladder_stochastic_forward.1} parent=1 // loop_pre_header
      _
    $region3: #{ladder_stochastic_forward.1} parent=1 // loop_header
      %s18 = sphi 0, %s22
      %p19 = scmp.ge.s32.totalorder %s18, 4
      %s28 = sphi 0, %s30
      %s31 = sphi 0, %s28
      %s32 = sphi 0, %s31
      %s48 = sphi 0, %s32
      %s54 = sphi 0, %s56
      %s57 = sphi 0, %s54
      %s58 = sphi 0, %s57
      %s74 = sphi 0, %s58
      %s78 = sphi 0, %s78
      %s80 = sphi 0, %s78
      %s81 = sphi 0, %s80
      %s95 = sphi 0, %s81
      %s99 = sphi 0, %s99
      %s101 = sphi 0, %s99
      %s102 = sphi 0, %s101
      %s116 = sphi 0, %s102
      %s120 = sphi 0, %s120
      %s122 = sphi 0, %s120
      %s123 = sphi 0, %s122
      %s137 = sphi 0, %s123
      %s141 = sphi 0, %s141
      %s143 = sphi 0, %s141
      %s144 = sphi 0, %s143
      %s158 = sphi 0, %s144
      %s162 = sphi 0, %s162
      %s164 = sphi 0, %s162
      %s165 = sphi 0, %s164
      %s179 = sphi 0, %s165
      %s183 = sphi 0, %s183
      %s185 = sphi 0, %s183
      %s186 = sphi 0, %s185
      %s200 = sphi 0, %s186
      %s204 = sphi 0, %s204
      %s206 = sphi 0, %s204
      %s207 = sphi 0, %s206
      %s221 = sphi 0, %s207
      %s227 = sphi 0, %s229
      %s230 = sphi 0, %s227
      %s231 = sphi 0, %s230
      %s247 = sphi 0, %s231
    $region4: #{ladder_stochastic_forward.1} parent=1 // loop_header_branch
      %21 = sbr.rel (%p19) target = $region8
    $region5: #{ladder_stochastic_forward.1} parent=1 // loop_body
      %s23 = ssub.s32 %s18, 1
      %s24 = ssub.s32 %s18, 2
      %s25 = sadd.s32 %s18, 1
      %s26 = ssub.s32 %s18, %s25
      %p27 = scmp.eq.s32.totalorder %s26, 0
      %s29 = sadd.s32 %s28, 1
      %s30 = scalar_select %p27, %s28, %s29
      %p33 = pneg %p27
      %p34 = scmp.eq.s32.totalorder %s18, 1
      %p35 = por %p33, %p34
      %p36 = scmp.ne.s32.totalorder %s28, %s31
      %p37 = scmp.eq.s32.totalorder %s18, 0
      %p38 = por %p36, %p37
      %p39 = scmp.ne.s32.totalorder %s28, %s31
      %p40 = scmp.eq.s32.totalorder %s23, 1
      %p41 = por %p39, %p40
      %p42 = scmp.ne.s32.totalorder %s31, %s32
      %p43 = scmp.eq.s32.totalorder %s23, 0
      %p44 = por %p42, %p43
      %p45 = scmp.ne.s32.totalorder %s31, %s32
      %p46 = scmp.eq.s32.totalorder %s24, 1
      %p47 = por %p45, %p46
      %p49 = scmp.ne.s32.totalorder %s32, %s48
      %p50 = scmp.eq.s32.totalorder %s24, 0
      %p51 = por %p49, %p50
      %s52 = ssub.s32 %s18, %s25
      %p53 = scmp.eq.s32.totalorder %s52, 0
      %s55 = sadd.s32 %s54, 1
      %s56 = scalar_select %p53, %s54, %s55
      %p59 = pneg %p53
      %p60 = scmp.eq.s32.totalorder %s18, 1
      %p61 = por %p59, %p60
      %p62 = scmp.ne.s32.totalorder %s54, %s57
      %p63 = scmp.eq.s32.totalorder %s18, 0
      %p64 = por %p62, %p63
      %p65 = scmp.ne.s32.totalorder %s54, %s57
      %p66 = scmp.eq.s32.totalorder %s23, 1
      %p67 = por %p65, %p66
      %p68 = scmp.ne.s32.totalorder %s57, %s58
      %p69 = scmp.eq.s32.totalorder %s23, 0
      %p70 = por %p68, %p69
      %p71 = scmp.ne.s32.totalorder %s57, %s58
      %p72 = scmp.eq.s32.totalorder %s24, 1
      %p73 = por %p71, %p72
      %p75 = scmp.ne.s32.totalorder %s58, %s74
      %p76 = scmp.eq.s32.totalorder %s24, 0
      %p77 = por %p75, %p76
      %s79 = sadd.s32 %s78, 1
      %p82 = scmp.eq.s32.totalorder %s18, 1
      %p83 = scmp.ne.s32.totalorder %s78, %s80
      %p84 = scmp.eq.s32.totalorder %s18, 0
      %p85 = por %p83, %p84
      %p86 = scmp.ne.s32.totalorder %s78, %s80
      %p87 = scmp.eq.s32.totalorder %s23, 1
      %p88 = por %p86, %p87
      %p89 = scmp.ne.s32.totalorder %s80, %s81
      %p90 = scmp.eq.s32.totalorder %s23, 0
      %p91 = por %p89, %p90
      %p92 = scmp.ne.s32.totalorder %s80, %s81
      %p93 = scmp.eq.s32.totalorder %s24, 1
      %p94 = por %p92, %p93
      %p96 = scmp.ne.s32.totalorder %s81, %s95
      %p97 = scmp.eq.s32.totalorder %s24, 0
      %p98 = por %p96, %p97
      %s100 = sadd.s32 %s99, 1
      %p103 = scmp.eq.s32.totalorder %s18, 1
      %p104 = scmp.ne.s32.totalorder %s99, %s101
      %p105 = scmp.eq.s32.totalorder %s18, 0
      %p106 = por %p104, %p105
      %p107 = scmp.ne.s32.totalorder %s99, %s101
      %p108 = scmp.eq.s32.totalorder %s23, 1
      %p109 = por %p107, %p108
      %p110 = scmp.ne.s32.totalorder %s101, %s102
      %p111 = scmp.eq.s32.totalorder %s23, 0
      %p112 = por %p110, %p111
      %p113 = scmp.ne.s32.totalorder %s101, %s102
      %p114 = scmp.eq.s32.totalorder %s24, 1
      %p115 = por %p113, %p114
      %p117 = scmp.ne.s32.totalorder %s102, %s116
      %p118 = scmp.eq.s32.totalorder %s24, 0
      %p119 = por %p117, %p118
      %s121 = sadd.s32 %s120, 1
      %p124 = scmp.eq.s32.totalorder %s18, 1
      %p125 = scmp.ne.s32.totalorder %s120, %s122
      %p126 = scmp.eq.s32.totalorder %s18, 0
      %p127 = por %p125, %p126
      %p128 = scmp.ne.s32.totalorder %s120, %s122
      %p129 = scmp.eq.s32.totalorder %s23, 1
      %p130 = por %p128, %p129
      %p131 = scmp.ne.s32.totalorder %s122, %s123
      %p132 = scmp.eq.s32.totalorder %s23, 0
      %p133 = por %p131, %p132
      %p134 = scmp.ne.s32.totalorder %s122, %s123
      %p135 = scmp.eq.s32.totalorder %s24, 1
      %p136 = por %p134, %p135
      %p138 = scmp.ne.s32.totalorder %s123, %s137
      %p139 = scmp.eq.s32.totalorder %s24, 0
      %p140 = por %p138, %p139
      %s142 = sadd.s32 %s141, 1
      %p145 = scmp.eq.s32.totalorder %s18, 1
      %p146 = scmp.ne.s32.totalorder %s141, %s143
      %p147 = scmp.eq.s32.totalorder %s18, 0
      %p148 = por %p146, %p147
      %p149 = scmp.ne.s32.totalorder %s141, %s143
      %p150 = scmp.eq.s32.totalorder %s23, 1
      %p151 = por %p149, %p150
      %p152 = scmp.ne.s32.totalorder %s143, %s144
      %p153 = scmp.eq.s32.totalorder %s23, 0
      %p154 = por %p152, %p153
      %p155 = scmp.ne.s32.totalorder %s143, %s144
      %p156 = scmp.eq.s32.totalorder %s24, 1
      %p157 = por %p155, %p156
      %p159 = scmp.ne.s32.totalorder %s144, %s158
      %p160 = scmp.eq.s32.totalorder %s24, 0
      %p161 = por %p159, %p160
      %s163 = sadd.s32 %s162, 1
      %p166 = scmp.eq.s32.totalorder %s18, 1
      %p167 = scmp.ne.s32.totalorder %s162, %s164
      %p168 = scmp.eq.s32.totalorder %s18, 0
      %p169 = por %p167, %p168
      %p170 = scmp.ne.s32.totalorder %s162, %s164
      %p171 = scmp.eq.s32.totalorder %s23, 1
      %p172 = por %p170, %p171
      %p173 = scmp.ne.s32.totalorder %s164, %s165
      %p174 = scmp.eq.s32.totalorder %s23, 0
      %p175 = por %p173, %p174
      %p176 = scmp.ne.s32.totalorder %s164, %s165
      %p177 = scmp.eq.s32.totalorder %s24, 1
      %p178 = por %p176, %p177
      %p180 = scmp.ne.s32.totalorder %s165, %s179
      %p181 = scmp.eq.s32.totalorder %s24, 0
      %p182 = por %p180, %p181
      %s184 = sadd.s32 %s183, 1
      %p187 = scmp.eq.s32.totalorder %s18, 1
      %p188 = scmp.ne.s32.totalorder %s183, %s185
      %p189 = scmp.eq.s32.totalorder %s18, 0
      %p190 = por %p188, %p189
      %p191 = scmp.ne.s32.totalorder %s183, %s185
      %p192 = scmp.eq.s32.totalorder %s23, 1
      %p193 = por %p191, %p192
      %p194 = scmp.ne.s32.totalorder %s185, %s186
      %p195 = scmp.eq.s32.totalorder %s23, 0
      %p196 = por %p194, %p195
      %p197 = scmp.ne.s32.totalorder %s185, %s186
      %p198 = scmp.eq.s32.totalorder %s24, 1
      %p199 = por %p197, %p198
      %p201 = scmp.ne.s32.totalorder %s186, %s200
      %p202 = scmp.eq.s32.totalorder %s24, 0
      %p203 = por %p201, %p202
      %s205 = sadd.s32 %s204, 1
      %p208 = scmp.eq.s32.totalorder %s18, 1
      %p209 = scmp.ne.s32.totalorder %s204, %s206
      %p210 = scmp.eq.s32.totalorder %s18, 0
      %p211 = por %p209, %p210
      %p212 = scmp.ne.s32.totalorder %s204, %s206
      %p213 = scmp.eq.s32.totalorder %s23, 1
      %p214 = por %p212, %p213
      %p215 = scmp.ne.s32.totalorder %s206, %s207
      %p216 = scmp.eq.s32.totalorder %s23, 0
      %p217 = por %p215, %p216
      %p218 = scmp.ne.s32.totalorder %s206, %s207
      %p219 = scmp.eq.s32.totalorder %s24, 1
      %p220 = por %p218, %p219
      %p222 = scmp.ne.s32.totalorder %s207, %s221
      %p223 = scmp.eq.s32.totalorder %s24, 0
      %p224 = por %p222, %p223
      %s225 = ssub.s32 %s18, %s25
      %p226 = scmp.eq.s32.totalorder %s225, 0
      %s228 = sadd.s32 %s227, 1
      %s229 = scalar_select %p226, %s227, %s228
      %p232 = pneg %p226
      %p233 = scmp.eq.s32.totalorder %s18, 1
      %p234 = por %p232, %p233
      %p235 = scmp.ne.s32.totalorder %s227, %s230
      %p236 = scmp.eq.s32.totalorder %s18, 0
      %p237 = por %p235, %p236
      %p238 = scmp.ne.s32.totalorder %s227, %s230
      %p239 = scmp.eq.s32.totalorder %s23, 1
      %p240 = por %p238, %p239
      %p241 = scmp.ne.s32.totalorder %s230, %s231
      %p242 = scmp.eq.s32.totalorder %s23, 0
      %p243 = por %p241, %p242
      %p244 = scmp.ne.s32.totalorder %s230, %s231
      %p245 = scmp.eq.s32.totalorder %s24, 1
      %p246 = por %p244, %p245
      %p248 = scmp.ne.s32.totalorder %s231, %s247
      %p249 = scmp.eq.s32.totalorder %s24, 0
      %p250 = por %p248, %p249
      %p251 = scmp.le.s32.totalorder 1, %s18
      %p252 = scmp.lt.s32.totalorder %s18, 3
      %p253 = pnand %p251, %p252
      %p254 = pneg %p253
      // Predicated region
      $region9: #{ladder_stochastic_forward.1} parent=5 // pred_check
        _
      $region10: #{ladder_stochastic_forward.1} parent=5 // pred_check_branch
        %256 = sbr.rel (%p253) target = $region12
      $region11: #{ladder_stochastic_forward.1} parent=5 // pred_region
        %s257 = ssub.s32 %s18, 1
        // Predicated region
        $region13: #{ladder_stochastic_forward.1} parent=11 // pred_check
          %p258 = pneg %p91
        $region14: #{ladder_stochastic_forward.1} parent=11 // pred_check_branch
          %260 = sbr.rel (%p258) target = $region16
        $region15: #{ladder_stochastic_forward.1} parent=11 // pred_region
          _
        $region16: #{ladder_stochastic_forward.1} parent=11 // pred_fallthru
          _
        // Predicated region
        $region17: #{ladder_stochastic_forward.1} parent=11 // pred_check
          %p261 = pneg %p112
        $region18: #{ladder_stochastic_forward.1} parent=11 // pred_check_branch
          %263 = sbr.rel (%p261) target = $region20
        $region19: #{ladder_stochastic_forward.1} parent=11 // pred_region
          _
        $region20: #{ladder_stochastic_forward.1} parent=11 // pred_fallthru
          _
        // Predicated region
        $region21: #{ladder_stochastic_forward.1} parent=11 // pred_check
          %p264 = pneg %p133
        $region22: #{ladder_stochastic_forward.1} parent=11 // pred_check_branch
          %266 = sbr.rel (%p264) target = $region24
        $region23: #{ladder_stochastic_forward.1} parent=11 // pred_region
          _
        $region24: #{ladder_stochastic_forward.1} parent=11 // pred_fallthru
          _
        // Predicated region
        $region25: #{ladder_stochastic_forward.1} parent=11 // pred_check
          %p267 = pneg %p154
        $region26: #{ladder_stochastic_forward.1} parent=11 // pred_check_branch
          %269 = sbr.rel (%p267) target = $region28
        $region27: #{ladder_stochastic_forward.1} parent=11 // pred_region
          _
        $region28: #{ladder_stochastic_forward.1} parent=11 // pred_fallthru
          _
        // Predicated region
        $region29: #{ladder_stochastic_forward.1} parent=11 // pred_check
          %p270 = pneg %p175
        $region30: #{ladder_stochastic_forward.1} parent=11 // pred_check_branch
          %272 = sbr.rel (%p270) target = $region32
        $region31: #{ladder_stochastic_forward.1} parent=11 // pred_region
          _
        $region32: #{ladder_stochastic_forward.1} parent=11 // pred_fallthru
          _
        // Predicated region
        $region33: #{ladder_stochastic_forward.1} parent=11 // pred_check
          %p273 = pneg %p196
        $region34: #{ladder_stochastic_forward.1} parent=11 // pred_check_branch
          %275 = sbr.rel (%p273) target = $region36
        $region35: #{ladder_stochastic_forward.1} parent=11 // pred_region
          _
        $region36: #{ladder_stochastic_forward.1} parent=11 // pred_fallthru
          _
        // Predicated region
        $region37: #{ladder_stochastic_forward.1} parent=11 // pred_check
          %p276 = pneg %p217
        $region38: #{ladder_stochastic_forward.1} parent=11 // pred_check_branch
          %278 = sbr.rel (%p276) target = $region40
        $region39: #{ladder_stochastic_forward.1} parent=11 // pred_region
          _
        $region40: #{ladder_stochastic_forward.1} parent=11 // pred_fallthru
          _
      $region12: #{ladder_stochastic_forward.1} parent=5 // pred_fallthru
        _
      %p279 = scmp.lt.s32.totalorder %s18, 2
      // Predicated region
      $region41: #{ladder_stochastic_forward.1} parent=5 // pred_check
        %p280 = pneg %p279
      $region42: #{ladder_stochastic_forward.1} parent=5 // pred_check_branch
        %282 = sbr.rel (%p280) target = $region44
      $region43: #{ladder_stochastic_forward.1} parent=5 // pred_region
        // Predicated region
        $region45: #{ladder_stochastic_forward.1} parent=43 // pred_check
          %p283 = pneg %p38
        $region46: #{ladder_stochastic_forward.1} parent=43 // pred_check_branch
          %285 = sbr.rel (%p283) target = $region48
        $region47: #{ladder_stochastic_forward.1} parent=43 // pred_region
          %p286 = scmp.lt.s32.totalorder %s18, 1
          %s287 = scalar_select %p286, %s18, 1
          %s288 = smul.addr %s287, 26
          %s289 = smul.addr %s288, 8
          %s290 = scalar_lea.vmem %s0, %s289
        $region48: #{ladder_stochastic_forward.1} parent=43 // pred_fallthru
          _
        // Predicated region
        $region49: #{ladder_stochastic_forward.1} parent=43 // pred_check
          %p291 = pneg %p64
        $region50: #{ladder_stochastic_forward.1} parent=43 // pred_check_branch
          %293 = sbr.rel (%p291) target = $region52
        $region51: #{ladder_stochastic_forward.1} parent=43 // pred_region
          %p294 = scmp.lt.s32.totalorder %s18, 1
          %s295 = scalar_select %p294, %s18, 1
          %s296 = scalar_lea.vmem %s1, %s295
        $region52: #{ladder_stochastic_forward.1} parent=43 // pred_fallthru
          _
      $region44: #{ladder_stochastic_forward.1} parent=5 // pred_fallthru
        _
      %p297 = scmp.le.s32.totalorder 1, %s18
      %p298 = scmp.lt.s32.totalorder %s18, 3
      %p299 = pnand %p297, %p298
      %p300 = pneg %p299
      // Predicated region
      $region53: #{ladder_stochastic_forward.1} parent=5 // pred_check
        _
      $region54: #{ladder_stochastic_forward.1} parent=5 // pred_check_branch
        %302 = sbr.rel (%p299) target = $region56
      $region55: #{ladder_stochastic_forward.1} parent=5 // pred_region
        %s303 = ssub.s32 %s18, 1
        %p304 = scmp.lt.s32.totalorder %s23, 1
        %s305 = scalar_select %p304, %s23, 1
        %s306 = smul.addr %s305, 26
        %s307 = smul.addr %s306, 8
        %s308 = scalar_lea.vmem %s0, %s307
        %p309 = pneg %p44
        %p310 = pneg %p41
        %p311 = scmp.lt.s32.totalorder %s23, 1
        %s312 = scalar_select %p311, %s23, 1
        %s313 = scalar_lea.vmem %s1, %s312
        %p314 = pneg %p70
        %p315 = pneg %p67
        %p316 = pneg %p91
        %p317 = pneg %p88
        %p318 = pneg %p112
        %p319 = pneg %p109
        %p320 = pneg %p133
        %p321 = pneg %p130
        %p322 = pneg %p154
        %p323 = pneg %p151
        %p324 = pneg %p175
        %p325 = pneg %p172
        %p326 = pneg %p196
        %p327 = pneg %p193
        %p328 = pneg %p217
        %p329 = pneg %p214
        %p330 = pneg %p243
        %p331 = pneg %p240
        %s332 = sand.u32 %s230, 1
        %s333 = scalar_lea.sflag [#allocation3], %s332
        %s334 = sand.u32 %s230, 1
        %s335 = scalar_lea.vmem [#allocation2], %s334
        %p336 = scmp.lt.s32.totalorder %s23, 1
        %s337 = scalar_select %p336, %s23, 1
        %s338 = smul.addr %s337, 26
        %s339 = smul.addr %s338, 8
        %s340 = scalar_lea.vmem %s0, %s339
        %p341 = scmp.lt.s32.totalorder %s23, 1
        %s342 = scalar_select %p341, %s23, 1
        %s343 = scalar_lea.vmem %s1, %s342
        %v344 = vld [vmem:[%s2] sm:$0xff]
        %v345 = vld [vmem:[%s340] sm:$0xff]
        %v346 = vld [vmem:[%s340 + $0x8] sm:$0xff]
        %v347 = vld [vmem:[%s340 + $0x10] sm:$0xff]
        %v348 = vld [vmem:[%s340 + $0x18] sm:$0xff]
        %v349 = vld [vmem:[%s340 + $0x20] sm:$0xff]
        %v350 = vld [vmem:[%s340 + $0x28] sm:$0xff]
        %v351 = vld [vmem:[%s340 + $0x30] sm:$0xff]
        %v352 = vld [vmem:[%s340 + $0x38] sm:$0xff]
        %v353 = vld [vmem:[%s340 + $0x40] sm:$0xff]
        %v354 = vld [vmem:[%s340 + $0x48] sm:$0xff]
        %v355 = vld [vmem:[%s340 + $0x50] sm:$0xff]
        %v356 = vld [vmem:[%s340 + $0x58] sm:$0xff]
        %v357 = vld [vmem:[%s340 + $0x60] sm:$0xff]
        %v358 = vld [vmem:[%s340 + $0x68] sm:$0xff]
        %v359 = vld [vmem:[%s340 + $0x70] sm:$0xff]
        %v360 = vld [vmem:[%s340 + $0x78] sm:$0xff]
        %v361 = vld [vmem:[%s340 + $0x80] sm:$0xff]
        %v362 = vld [vmem:[%s340 + $0x88] sm:$0xff]
        %v363 = vld [vmem:[%s340 + $0x90] sm:$0xff]
        %v364 = vld [vmem:[%s340 + $0x98] sm:$0xff]
        %v365 = vld [vmem:[%s340 + $0xa0] sm:$0xff]
        %v366 = vld [vmem:[%s340 + $0xa8] sm:$0xff]
        %v367 = vld [vmem:[%s340 + $0xb0] sm:$0xff]
        %v368 = vld [vmem:[%s340 + $0xb8] sm:$0xff]
        %v369 = vld [vmem:[%s340 + $0xc0] sm:$0xf]
        %v370 = vld [vmem:[%s340 + $0xc8] sm:$0xf]
        %v371 = vld [vmem:[%s3] sm:$0xff]
        %373 = vset.pattern.permute.xlu0 0
        %374 = vperm.xlu0 %373, %v371
        %v375 = vpop.permute.xlu0 %374
        %vm377 = vcmask 818176
        %v379 = vsel %vm377, %v344, 0
        %vm381 = vcmask 1043456
        %v383 = vsel %vm381, %v369, 0
        %v386 = vsel %vm381, %v370, 0
        %388 = vmatprep.subr.mxu0 0.0
        %389 = vmatpush1.msra.mxu0 0.0
        %390 = vmatprep.subr.mxu0 0.0
        %391 = vmatpush1.msra.mxu0 0.0
        %392 = vmatprep.subr.mxu0 0.0
        %393 = vmatpush1.msra.mxu0 0.0
        %394 = vmatprep.subr.mxu0 %v386
        %395 = vmatpush1.msra.mxu0 %v383
        %396 = vmatprep.subr.mxu0 %v368
        %397 = vmatpush1.msra.mxu0 %v367
        %398 = vmatprep.subr.mxu0 %v366
        %399 = vmatpush1.msra.mxu0 %v365
        %400 = vmatprep.subr.mxu0 %v364
        %401 = vmatpush1.msra.mxu0 %v363
        %402 = vmatprep.subr.mxu0 %v362
        %403 = vmatpush1.msra.mxu0 %v361
        %404 = vmatprep.subr.mxu0 %v360
        %405 = vmatpush1.msra.mxu0 %v359
        %406 = vmatprep.subr.mxu0 %v358
        %407 = vmatpush1.msra.mxu0 %v357
        %408 = vmatprep.subr.mxu0 %v356
        %409 = vmatpush1.msra.mxu0 %v355
        %410 = vmatprep.subr.mxu0 %v354
        %411 = vmatpush1.msra.mxu0 %v353
        %412 = vmatprep.subr.mxu0 %v352
        %413 = vmatpush1.msra.mxu0 %v351
        %414 = vmatprep.subr.mxu0 %v350
        %415 = vmatpush1.msra.mxu0 %v349
        %416 = vmatprep.subr.mxu0 %v348
        %417 = vmatpush1.msra.mxu0 %v347
        %418 = vmatprep.subr.mxu0 %v346
        %419 = vmatpush1.msra.mxu0 %v345
        %420 = vmatprep.subr.mxu0 0.0
        %421 = vmatpush2.msra.mxu0 0.0
        %422 = vmatprep.subr.mxu0 0.0
        %423 = vmatpush2.msra.mxu0 0.0
        %424 = vmatprep.subr.mxu0 0.0
        %425 = vmatpush2.msra.mxu0 0.0
        %426 = vmatprep.subr.mxu0 0.0
        %427 = vmatpush2.msra.mxu0 0.0
        %428 = vmatprep.subr.mxu0 0.0
        %429 = vmatpush2.msra.mxu0 0.0
        %430 = vmatprep.subr.mxu0 0.0
        %431 = vmatpush2.msra.mxu0 0.0
        %432 = vmatprep.subr.mxu0 0.0
        %433 = vmatpush2.msra.mxu0 0.0
        %434 = vmatprep.subr.mxu0 0.0
        %435 = vmatpush2.msra.mxu0 0.0
        %436 = vmatprep.subr.mxu0 0.0
        %437 = vmatpush2.msra.mxu0 0.0
        %438 = vmatprep.subr.mxu0 0.0
        %439 = vmatpush2.msra.mxu0 0.0
        %440 = vmatprep.subr.mxu0 0.0
        %441 = vmatpush2.msra.mxu0 0.0
        %442 = vmatprep.subr.mxu0 0.0
        %443 = vmatpush2.msra.mxu0 0.0
        %444 = vmatprep.subr.mxu0 0.0
        %445 = vmatpush2.msra.mxu0 0.0
        %446 = vmatprep.subr.mxu0 0.0
        %447 = vmatpush2.msra.mxu0 0.0
        %448 = vmatprep.subr.mxu0 0.0
        %449 = vmatpush2.msra.mxu0 0.0
        %450 = vmatprep.subr.mxu0 0.0
        %451 = vmatpush2.msra.mxu0 0.0
        %452 = vmatprep.mubr.f32.mxu0 0.0
        %453 = vmatmul.mubr.f32.gmra.mxu0 %v379
        %v454 = vpop.f32.mrf.mxu0
        %v455 = vadd.f32 %v375, %v454
        %v456 = vpop.f32.mrf.mxu0
        %v457 = vadd.f32 %v375, %v456
        %458 = vdwg.mxu0
        %v459 = vmul.f32 %v455, 0.5
        %v460 = vmul.f32 %v457, 0.5
        %v461 = vmul.f32 %v455, 0.70710677
        %v462 = vmul.f32 %v457, 0.70710677
        %v463 = verf.f32.pop %v461
        %v464 = verf.f32.pop %v462
        %v465 = vadd.f32 %v463, 1.0
        %v466 = vadd.f32 %v464, 1.0
        %v467 = vmul.f32 %v459, %v465
        %v468 = vmul.f32 %v460, %v466
        %v469 = vld [vmem:[%s5] sm:$0x1]
        %v470 = vld [vmem:[%s4] sm:$0xff]
        %v471 = vld [vmem:[%s4 + $0x8] sm:$0xff]
        %v472 = vld [vmem:[%s4 + $0x10] sm:$0xff]
        %v473 = vld [vmem:[%s4 + $0x18] sm:$0xff]
        %v474 = vld [vmem:[%s4 + $0x20] sm:$0xff]
        %v475 = vld [vmem:[%s4 + $0x28] sm:$0xff]
        %v476 = vld [vmem:[%s4 + $0x30] sm:$0xff]
        %v477 = vld [vmem:[%s4 + $0x38] sm:$0xff]
        %v478 = vld [vmem:[%s4 + $0x40] sm:$0xff]
        %v479 = vld [vmem:[%s4 + $0x48] sm:$0xff]
        %v480 = vld [vmem:[%s4 + $0x50] sm:$0xff]
        %v481 = vld [vmem:[%s4 + $0x58] sm:$0xff]
        %v482 = vld [vmem:[%s4 + $0x60] sm:$0xff]
        %v483 = vld [vmem:[%s4 + $0x68] sm:$0xff]
        %v484 = vld [vmem:[%s4 + $0x70] sm:$0xff]
        %v485 = vld [vmem:[%s4 + $0x78] sm:$0xff]
        %v486 = vld [vmem:[%s4 + $0x80] sm:$0xff]
        %v487 = vld [vmem:[%s4 + $0x88] sm:$0xff]
        %vm488 = vcmask 130048
        %v490 = vsel %vm488, %v468, 0
        %492 = vmatprep.subr.mxu0 0.0
        %493 = vmatpush1.msra.mxu0 %v485
        %494 = vmatprep.subr.mxu0 0.0
        %495 = vmatpush1.msra.mxu0 %v484
        %496 = vmatprep.subr.mxu0 0.0
        %497 = vmatpush1.msra.mxu0 %v483
        %498 = vmatprep.subr.mxu0 0.0
        %499 = vmatpush1.msra.mxu0 %v482
        %500 = vmatprep.subr.mxu0 0.0
        %501 = vmatpush1.msra.mxu0 %v481
        %502 = vmatprep.subr.mxu0 0.0
        %503 = vmatpush1.msra.mxu0 %v480
        %504 = vmatprep.subr.mxu0 0.0
        %505 = vmatpush1.msra.mxu0 %v479
        %506 = vmatprep.subr.mxu0 0.0
        %507 = vmatpush1.msra.mxu0 %v478
        %508 = vmatprep.subr.mxu0 0.0
        %509 = vmatpush1.msra.mxu0 %v477
        %510 = vmatprep.subr.mxu0 0.0
        %511 = vmatpush1.msra.mxu0 %v476
        %512 = vmatprep.subr.mxu0 0.0
        %513 = vmatpush1.msra.mxu0 %v475
        %514 = vmatprep.subr.mxu0 0.0
        %515 = vmatpush1.msra.mxu0 %v474
        %516 = vmatprep.subr.mxu0 0.0
        %517 = vmatpush1.msra.mxu0 %v473
        %518 = vmatprep.subr.mxu0 0.0
        %519 = vmatpush1.msra.mxu0 %v472
        %520 = vmatprep.subr.mxu0 0.0
        %521 = vmatpush1.msra.mxu0 %v471
        %522 = vmatprep.subr.mxu0 0.0
        %523 = vmatpush1.msra.mxu0 %v470
        %524 = vmatprep.subr.mxu0 0.0
        %525 = vmatpush2.msra.mxu0 0.0
        %526 = vmatprep.subr.mxu0 0.0
        %527 = vmatpush2.msra.mxu0 0.0
        %528 = vmatprep.subr.mxu0 0.0
        %529 = vmatpush2.msra.mxu0 0.0
        %530 = vmatprep.subr.mxu0 0.0
        %531 = vmatpush2.msra.mxu0 0.0
        %532 = vmatprep.subr.mxu0 0.0
        %533 = vmatpush2.msra.mxu0 0.0
        %534 = vmatprep.subr.mxu0 0.0
        %535 = vmatpush2.msra.mxu0 0.0
        %536 = vmatprep.subr.mxu0 0.0
        %537 = vmatpush2.msra.mxu0 0.0
        %538 = vmatprep.subr.mxu0 0.0
        %539 = vmatpush2.msra.mxu0 0.0
        %540 = vmatprep.subr.mxu0 0.0
        %541 = vmatpush2.msra.mxu0 0.0
        %542 = vmatprep.subr.mxu0 0.0
        %543 = vmatpush2.msra.mxu0 0.0
        %544 = vmatprep.subr.mxu0 0.0
        %545 = vmatpush2.msra.mxu0 0.0
        %546 = vmatprep.subr.mxu0 0.0
        %547 = vmatpush2.msra.mxu0 0.0
        %548 = vmatprep.subr.mxu0 0.0
        %549 = vmatpush2.msra.mxu0 0.0
        %550 = vmatprep.subr.mxu0 0.0
        %551 = vmatpush2.msra.mxu0 0.0
        %552 = vmatprep.subr.mxu0 0.0
        %553 = vmatpush2.msra.mxu0 %v487
        %554 = vmatprep.subr.mxu0 0.0
        %555 = vmatpush2.msra.mxu0 %v486
        %556 = vmatprep.mubr.f32.mxu0 %v490
        %557 = vmatmul.mubr.f32.gmra.mxu0 %v467
        %v558 = vpop.f32.mrf.mxu0
        %v559 = vadd.f32 0.0, %v558
        %v560 = vpop.f32.mrf.mxu0
        %561 = vdwg.mxu0
        %v562 = vadd.f32 %v469, %v559
        %s563 = scalar_lea.vmem %s4, 144
        %v564 = vld [vmem:[%s563] sm:$0xff]
        %v565 = vld [vmem:[%s563 + $0x8] sm:$0xff]
        %v566 = vld [vmem:[%s563 + $0x10] sm:$0xff]
        %v567 = vld [vmem:[%s563 + $0x18] sm:$0xff]
        %v568 = vld [vmem:[%s563 + $0x20] sm:$0xff]
        %v569 = vld [vmem:[%s563 + $0x28] sm:$0xff]
        %v570 = vld [vmem:[%s563 + $0x30] sm:$0xff]
        %v571 = vld [vmem:[%s563 + $0x38] sm:$0xff]
        %v572 = vld [vmem:[%s563 + $0x40] sm:$0xff]
        %v573 = vld [vmem:[%s563 + $0x48] sm:$0xff]
        %v574 = vld [vmem:[%s563 + $0x50] sm:$0xff]
        %v575 = vld [vmem:[%s563 + $0x58] sm:$0xff]
        %v576 = vld [vmem:[%s563 + $0x60] sm:$0xff]
        %v577 = vld [vmem:[%s563 + $0x68] sm:$0xff]
        %v578 = vld [vmem:[%s563 + $0x70] sm:$0xff]
        %v579 = vld [vmem:[%s563 + $0x78] sm:$0xff]
        %v580 = vld [vmem:[%s563 + $0x80] sm:$0xff]
        %v581 = vld [vmem:[%s563 + $0x88] sm:$0xff]
        %v583 = vrot.slane %v467, 1
        %v584 = vrot.slane %v468, 1
        %v586 = vsel %vm488, %v584, 0
        %588 = vmatprep.subr.mxu0 0.0
        %589 = vmatpush1.msra.mxu0 %v579
        %590 = vmatprep.subr.mxu0 0.0
        %591 = vmatpush1.msra.mxu0 %v578
        %592 = vmatprep.subr.mxu0 0.0
        %593 = vmatpush1.msra.mxu0 %v577
        %594 = vmatprep.subr.mxu0 0.0
        %595 = vmatpush1.msra.mxu0 %v576
        %596 = vmatprep.subr.mxu0 0.0
        %597 = vmatpush1.msra.mxu0 %v575
        %598 = vmatprep.subr.mxu0 0.0
        %599 = vmatpush1.msra.mxu0 %v574
        %600 = vmatprep.subr.mxu0 0.0
        %601 = vmatpush1.msra.mxu0 %v573
        %602 = vmatprep.subr.mxu0 0.0
        %603 = vmatpush1.msra.mxu0 %v572
        %604 = vmatprep.subr.mxu0 0.0
        %605 = vmatpush1.msra.mxu0 %v571
        %606 = vmatprep.subr.mxu0 0.0
        %607 = vmatpush1.msra.mxu0 %v570
        %608 = vmatprep.subr.mxu0 0.0
        %609 = vmatpush1.msra.mxu0 %v569
        %610 = vmatprep.subr.mxu0 0.0
        %611 = vmatpush1.msra.mxu0 %v568
        %612 = vmatprep.subr.mxu0 0.0
        %613 = vmatpush1.msra.mxu0 %v567
        %614 = vmatprep.subr.mxu0 0.0
        %615 = vmatpush1.msra.mxu0 %v566
        %616 = vmatprep.subr.mxu0 0.0
        %617 = vmatpush1.msra.mxu0 %v565
        %618 = vmatprep.subr.mxu0 0.0
        %619 = vmatpush1.msra.mxu0 %v564
        %620 = vmatprep.subr.mxu0 0.0
        %621 = vmatpush2.msra.mxu0 0.0
        %622 = vmatprep.subr.mxu0 0.0
        %623 = vmatpush2.msra.mxu0 0.0
        %624 = vmatprep.subr.mxu0 0.0
        %625 = vmatpush2.msra.mxu0 0.0
        %626 = vmatprep.subr.mxu0 0.0
        %627 = vmatpush2.msra.mxu0 0.0
        %628 = vmatprep.subr.mxu0 0.0
        %629 = vmatpush2.msra.mxu0 0.0
        %630 = vmatprep.subr.mxu0 0.0
        %631 = vmatpush2.msra.mxu0 0.0
        %632 = vmatprep.subr.mxu0 0.0
        %633 = vmatpush2.msra.mxu0 0.0
        %634 = vmatprep.subr.mxu0 0.0
        %635 = vmatpush2.msra.mxu0 0.0
        %636 = vmatprep.subr.mxu0 0.0
        %637 = vmatpush2.msra.mxu0 0.0
        %638 = vmatprep.subr.mxu0 0.0
        %639 = vmatpush2.msra.mxu0 0.0
        %640 = vmatprep.subr.mxu0 0.0
        %641 = vmatpush2.msra.mxu0 0.0
        %642 = vmatprep.subr.mxu0 0.0
        %643 = vmatpush2.msra.mxu0 0.0
        %644 = vmatprep.subr.mxu0 0.0
        %645 = vmatpush2.msra.mxu0 0.0
        %646 = vmatprep.subr.mxu0 0.0
        %647 = vmatpush2.msra.mxu0 0.0
        %648 = vmatprep.subr.mxu0 0.0
        %649 = vmatpush2.msra.mxu0 %v581
        %650 = vmatprep.subr.mxu0 0.0
        %651 = vmatpush2.msra.mxu0 %v580
        %652 = vmatprep.mubr.f32.mxu0 %v586
        %653 = vmatmul.mubr.f32.gmra.mxu0 %v583
        %v654 = vpop.f32.mrf.mxu0
        %v655 = vadd.f32 0.0, %v654
        %v656 = vpop.f32.mrf.mxu0
        %657 = vdwg.mxu0
        %v658 = vadd.f32 %v562, %v655
        %s659 = scalar_lea.vmem %s4, 288
        %v660 = vld [vmem:[%s659] sm:$0xff]
        %v661 = vld [vmem:[%s659 + $0x8] sm:$0xff]
        %v662 = vld [vmem:[%s659 + $0x10] sm:$0xff]
        %v663 = vld [vmem:[%s659 + $0x18] sm:$0xff]
        %v664 = vld [vmem:[%s659 + $0x20] sm:$0xff]
        %v665 = vld [vmem:[%s659 + $0x28] sm:$0xff]
        %v666 = vld [vmem:[%s659 + $0x30] sm:$0xff]
        %v667 = vld [vmem:[%s659 + $0x38] sm:$0xff]
        %v668 = vld [vmem:[%s659 + $0x40] sm:$0xff]
        %v669 = vld [vmem:[%s659 + $0x48] sm:$0xff]
        %v670 = vld [vmem:[%s659 + $0x50] sm:$0xff]
        %v671 = vld [vmem:[%s659 + $0x58] sm:$0xff]
        %v672 = vld [vmem:[%s659 + $0x60] sm:$0xff]
        %v673 = vld [vmem:[%s659 + $0x68] sm:$0xff]
        %v674 = vld [vmem:[%s659 + $0x70] sm:$0xff]
        %v675 = vld [vmem:[%s659 + $0x78] sm:$0xff]
        %v676 = vld [vmem:[%s659 + $0x80] sm:$0xff]
        %v677 = vld [vmem:[%s659 + $0x88] sm:$0xff]
        %v678 = vrot.slane %v467, 2
        %v679 = vrot.slane %v468, 2
        %v681 = vsel %vm488, %v679, 0
        %683 = vmatprep.subr.mxu0 0.0
        %684 = vmatpush1.msra.mxu0 %v675
        %685 = vmatprep.subr.mxu0 0.0
        %686 = vmatpush1.msra.mxu0 %v674
        %687 = vmatprep.subr.mxu0 0.0
        %688 = vmatpush1.msra.mxu0 %v673
        %689 = vmatprep.subr.mxu0 0.0
        %690 = vmatpush1.msra.mxu0 %v672
        %691 = vmatprep.subr.mxu0 0.0
        %692 = vmatpush1.msra.mxu0 %v671
        %693 = vmatprep.subr.mxu0 0.0
        %694 = vmatpush1.msra.mxu0 %v670
        %695 = vmatprep.subr.mxu0 0.0
        %696 = vmatpush1.msra.mxu0 %v669
        %697 = vmatprep.subr.mxu0 0.0
        %698 = vmatpush1.msra.mxu0 %v668
        %699 = vmatprep.subr.mxu0 0.0
        %700 = vmatpush1.msra.mxu0 %v667
        %701 = vmatprep.subr.mxu0 0.0
        %702 = vmatpush1.msra.mxu0 %v666
        %703 = vmatprep.subr.mxu0 0.0
        %704 = vmatpush1.msra.mxu0 %v665
        %705 = vmatprep.subr.mxu0 0.0
        %706 = vmatpush1.msra.mxu0 %v664
        %707 = vmatprep.subr.mxu0 0.0
        %708 = vmatpush1.msra.mxu0 %v663
        %709 = vmatprep.subr.mxu0 0.0
        %710 = vmatpush1.msra.mxu0 %v662
        %711 = vmatprep.subr.mxu0 0.0
        %712 = vmatpush1.msra.mxu0 %v661
        %713 = vmatprep.subr.mxu0 0.0
        %714 = vmatpush1.msra.mxu0 %v660
        %715 = vmatprep.subr.mxu0 0.0
        %716 = vmatpush2.msra.mxu0 0.0
        %717 = vmatprep.subr.mxu0 0.0
        %718 = vmatpush2.msra.mxu0 0.0
        %719 = vmatprep.subr.mxu0 0.0
        %720 = vmatpush2.msra.mxu0 0.0
        %721 = vmatprep.subr.mxu0 0.0
        %722 = vmatpush2.msra.mxu0 0.0
        %723 = vmatprep.subr.mxu0 0.0
        %724 = vmatpush2.msra.mxu0 0.0
        %725 = vmatprep.subr.mxu0 0.0
        %726 = vmatpush2.msra.mxu0 0.0
        %727 = vmatprep.subr.mxu0 0.0
        %728 = vmatpush2.msra.mxu0 0.0
        %729 = vmatprep.subr.mxu0 0.0
        %730 = vmatpush2.msra.mxu0 0.0
        %731 = vmatprep.subr.mxu0 0.0
        %732 = vmatpush2.msra.mxu0 0.0
        %733 = vmatprep.subr.mxu0 0.0
        %734 = vmatpush2.msra.mxu0 0.0
        %735 = vmatprep.subr.mxu0 0.0
        %736 = vmatpush2.msra.mxu0 0.0
        %737 = vmatprep.subr.mxu0 0.0
        %738 = vmatpush2.msra.mxu0 0.0
        %739 = vmatprep.subr.mxu0 0.0
        %740 = vmatpush2.msra.mxu0 0.0
        %741 = vmatprep.subr.mxu0 0.0
        %742 = vmatpush2.msra.mxu0 0.0
        %743 = vmatprep.subr.mxu0 0.0
        %744 = vmatpush2.msra.mxu0 %v677
        %745 = vmatprep.subr.mxu0 0.0
        %746 = vmatpush2.msra.mxu0 %v676
        %747 = vmatprep.mubr.f32.mxu0 %v681
        %748 = vmatmul.mubr.f32.gmra.mxu0 %v678
        %v749 = vpop.f32.mrf.mxu0
        %v750 = vadd.f32 0.0, %v749
        %v751 = vpop.f32.mrf.mxu0
        %752 = vdwg.mxu0
        %v753 = vadd.f32 %v658, %v750
        %s754 = scalar_lea.vmem %s4, 432
        %v755 = vld [vmem:[%s754] sm:$0xff]
        %v756 = vld [vmem:[%s754 + $0x8] sm:$0xff]
        %v757 = vld [vmem:[%s754 + $0x10] sm:$0xff]
        %v758 = vld [vmem:[%s754 + $0x18] sm:$0xff]
        %v759 = vld [vmem:[%s754 + $0x20] sm:$0xff]
        %v760 = vld [vmem:[%s754 + $0x28] sm:$0xff]
        %v761 = vld [vmem:[%s754 + $0x30] sm:$0xff]
        %v762 = vld [vmem:[%s754 + $0x38] sm:$0xff]
        %v763 = vld [vmem:[%s754 + $0x40] sm:$0xff]
        %v764 = vld [vmem:[%s754 + $0x48] sm:$0xff]
        %v765 = vld [vmem:[%s754 + $0x50] sm:$0xff]
        %v766 = vld [vmem:[%s754 + $0x58] sm:$0xff]
        %v767 = vld [vmem:[%s754 + $0x60] sm:$0xff]
        %v768 = vld [vmem:[%s754 + $0x68] sm:$0xff]
        %v769 = vld [vmem:[%s754 + $0x70] sm:$0xff]
        %v770 = vld [vmem:[%s754 + $0x78] sm:$0xff]
        %v771 = vld [vmem:[%s754 + $0x80] sm:$0xff]
        %v772 = vld [vmem:[%s754 + $0x88] sm:$0xff]
        %v773 = vrot.slane %v467, 3
        %v774 = vrot.slane %v468, 3
        %v776 = vsel %vm488, %v774, 0
        %778 = vmatprep.subr.mxu0 0.0
        %779 = vmatpush1.msra.mxu0 %v770
        %780 = vmatprep.subr.mxu0 0.0
        %781 = vmatpush1.msra.mxu0 %v769
        %782 = vmatprep.subr.mxu0 0.0
        %783 = vmatpush1.msra.mxu0 %v768
        %784 = vmatprep.subr.mxu0 0.0
        %785 = vmatpush1.msra.mxu0 %v767
        %786 = vmatprep.subr.mxu0 0.0
        %787 = vmatpush1.msra.mxu0 %v766
        %788 = vmatprep.subr.mxu0 0.0
        %789 = vmatpush1.msra.mxu0 %v765
        %790 = vmatprep.subr.mxu0 0.0
        %791 = vmatpush1.msra.mxu0 %v764
        %792 = vmatprep.subr.mxu0 0.0
        %793 = vmatpush1.msra.mxu0 %v763
        %794 = vmatprep.subr.mxu0 0.0
        %795 = vmatpush1.msra.mxu0 %v762
        %796 = vmatprep.subr.mxu0 0.0
        %797 = vmatpush1.msra.mxu0 %v761
        %798 = vmatprep.subr.mxu0 0.0
        %799 = vmatpush1.msra.mxu0 %v760
        %800 = vmatprep.subr.mxu0 0.0
        %801 = vmatpush1.msra.mxu0 %v759
        %802 = vmatprep.subr.mxu0 0.0
        %803 = vmatpush1.msra.mxu0 %v758
        %804 = vmatprep.subr.mxu0 0.0
        %805 = vmatpush1.msra.mxu0 %v757
        %806 = vmatprep.subr.mxu0 0.0
        %807 = vmatpush1.msra.mxu0 %v756
        %808 = vmatprep.subr.mxu0 0.0
        %809 = vmatpush1.msra.mxu0 %v755
        %810 = vmatprep.subr.mxu0 0.0
        %811 = vmatpush2.msra.mxu0 0.0
        %812 = vmatprep.subr.mxu0 0.0
        %813 = vmatpush2.msra.mxu0 0.0
        %814 = vmatprep.subr.mxu0 0.0
        %815 = vmatpush2.msra.mxu0 0.0
        %816 = vmatprep.subr.mxu0 0.0
        %817 = vmatpush2.msra.mxu0 0.0
        %818 = vmatprep.subr.mxu0 0.0
        %819 = vmatpush2.msra.mxu0 0.0
        %820 = vmatprep.subr.mxu0 0.0
        %821 = vmatpush2.msra.mxu0 0.0
        %822 = vmatprep.subr.mxu0 0.0
        %823 = vmatpush2.msra.mxu0 0.0
        %824 = vmatprep.subr.mxu0 0.0
        %825 = vmatpush2.msra.mxu0 0.0
        %826 = vmatprep.subr.mxu0 0.0
        %827 = vmatpush2.msra.mxu0 0.0
        %828 = vmatprep.subr.mxu0 0.0
        %829 = vmatpush2.msra.mxu0 0.0
        %830 = vmatprep.subr.mxu0 0.0
        %831 = vmatpush2.msra.mxu0 0.0
        %832 = vmatprep.subr.mxu0 0.0
        %833 = vmatpush2.msra.mxu0 0.0
        %834 = vmatprep.subr.mxu0 0.0
        %835 = vmatpush2.msra.mxu0 0.0
        %836 = vmatprep.subr.mxu0 0.0
        %837 = vmatpush2.msra.mxu0 0.0
        %838 = vmatprep.subr.mxu0 0.0
        %839 = vmatpush2.msra.mxu0 %v772
        %840 = vmatprep.subr.mxu0 0.0
        %841 = vmatpush2.msra.mxu0 %v771
        %842 = vmatprep.mubr.f32.mxu0 %v776
        %843 = vmatmul.mubr.f32.gmra.mxu0 %v773
        %v844 = vpop.f32.mrf.mxu0
        %v845 = vadd.f32 0.0, %v844
        %v846 = vpop.f32.mrf.mxu0
        %847 = vdwg.mxu0
        %v848 = vadd.f32 %v753, %v845
        %s849 = scalar_lea.vmem %s4, 576
        %v850 = vld [vmem:[%s849] sm:$0xff]
        %v851 = vld [vmem:[%s849 + $0x8] sm:$0xff]
        %v852 = vld [vmem:[%s849 + $0x10] sm:$0xff]
        %v853 = vld [vmem:[%s849 + $0x18] sm:$0xff]
        %v854 = vld [vmem:[%s849 + $0x20] sm:$0xff]
        %v855 = vld [vmem:[%s849 + $0x28] sm:$0xff]
        %v856 = vld [vmem:[%s849 + $0x30] sm:$0xff]
        %v857 = vld [vmem:[%s849 + $0x38] sm:$0xff]
        %v858 = vld [vmem:[%s849 + $0x40] sm:$0xff]
        %v859 = vld [vmem:[%s849 + $0x48] sm:$0xff]
        %v860 = vld [vmem:[%s849 + $0x50] sm:$0xff]
        %v861 = vld [vmem:[%s849 + $0x58] sm:$0xff]
        %v862 = vld [vmem:[%s849 + $0x60] sm:$0xff]
        %v863 = vld [vmem:[%s849 + $0x68] sm:$0xff]
        %v864 = vld [vmem:[%s849 + $0x70] sm:$0xff]
        %v865 = vld [vmem:[%s849 + $0x78] sm:$0xff]
        %v866 = vld [vmem:[%s849 + $0x80] sm:$0xff]
        %v867 = vld [vmem:[%s849 + $0x88] sm:$0xff]
        %v868 = vrot.slane %v467, 4
        %v869 = vrot.slane %v468, 4
        %v871 = vsel %vm488, %v869, 0
        %873 = vmatprep.subr.mxu0 0.0
        %874 = vmatpush1.msra.mxu0 %v865
        %875 = vmatprep.subr.mxu0 0.0
        %876 = vmatpush1.msra.mxu0 %v864
        %877 = vmatprep.subr.mxu0 0.0
        %878 = vmatpush1.msra.mxu0 %v863
        %879 = vmatprep.subr.mxu0 0.0
        %880 = vmatpush1.msra.mxu0 %v862
        %881 = vmatprep.subr.mxu0 0.0
        %882 = vmatpush1.msra.mxu0 %v861
        %883 = vmatprep.subr.mxu0 0.0
        %884 = vmatpush1.msra.mxu0 %v860
        %885 = vmatprep.subr.mxu0 0.0
        %886 = vmatpush1.msra.mxu0 %v859
        %887 = vmatprep.subr.mxu0 0.0
        %888 = vmatpush1.msra.mxu0 %v858
        %889 = vmatprep.subr.mxu0 0.0
        %890 = vmatpush1.msra.mxu0 %v857
        %891 = vmatprep.subr.mxu0 0.0
        %892 = vmatpush1.msra.mxu0 %v856
        %893 = vmatprep.subr.mxu0 0.0
        %894 = vmatpush1.msra.mxu0 %v855
        %895 = vmatprep.subr.mxu0 0.0
        %896 = vmatpush1.msra.mxu0 %v854
        %897 = vmatprep.subr.mxu0 0.0
        %898 = vmatpush1.msra.mxu0 %v853
        %899 = vmatprep.subr.mxu0 0.0
        %900 = vmatpush1.msra.mxu0 %v852
        %901 = vmatprep.subr.mxu0 0.0
        %902 = vmatpush1.msra.mxu0 %v851
        %903 = vmatprep.subr.mxu0 0.0
        %904 = vmatpush1.msra.mxu0 %v850
        %905 = vmatprep.subr.mxu0 0.0
        %906 = vmatpush2.msra.mxu0 0.0
        %907 = vmatprep.subr.mxu0 0.0
        %908 = vmatpush2.msra.mxu0 0.0
        %909 = vmatprep.subr.mxu0 0.0
        %910 = vmatpush2.msra.mxu0 0.0
        %911 = vmatprep.subr.mxu0 0.0
        %912 = vmatpush2.msra.mxu0 0.0
        %913 = vmatprep.subr.mxu0 0.0
        %914 = vmatpush2.msra.mxu0 0.0
        %915 = vmatprep.subr.mxu0 0.0
        %916 = vmatpush2.msra.mxu0 0.0
        %917 = vmatprep.subr.mxu0 0.0
        %918 = vmatpush2.msra.mxu0 0.0
        %919 = vmatprep.subr.mxu0 0.0
        %920 = vmatpush2.msra.mxu0 0.0
        %921 = vmatprep.subr.mxu0 0.0
        %922 = vmatpush2.msra.mxu0 0.0
        %923 = vmatprep.subr.mxu0 0.0
        %924 = vmatpush2.msra.mxu0 0.0
        %925 = vmatprep.subr.mxu0 0.0
        %926 = vmatpush2.msra.mxu0 0.0
        %927 = vmatprep.subr.mxu0 0.0
        %928 = vmatpush2.msra.mxu0 0.0
        %929 = vmatprep.subr.mxu0 0.0
        %930 = vmatpush2.msra.mxu0 0.0
        %931 = vmatprep.subr.mxu0 0.0
        %932 = vmatpush2.msra.mxu0 0.0
        %933 = vmatprep.subr.mxu0 0.0
        %934 = vmatpush2.msra.mxu0 %v867
        %935 = vmatprep.subr.mxu0 0.0
        %936 = vmatpush2.msra.mxu0 %v866
        %937 = vmatprep.mubr.f32.mxu0 %v871
        %938 = vmatmul.mubr.f32.gmra.mxu0 %v868
        %v939 = vpop.f32.mrf.mxu0
        %v940 = vadd.f32 0.0, %v939
        %v941 = vpop.f32.mrf.mxu0
        %942 = vdwg.mxu0
        %v943 = vadd.f32 %v848, %v940
        %s944 = scalar_lea.vmem %s4, 720
        %v945 = vld [vmem:[%s944] sm:$0xff]
        %v946 = vld [vmem:[%s944 + $0x8] sm:$0xff]
        %v947 = vld [vmem:[%s944 + $0x10] sm:$0xff]
        %v948 = vld [vmem:[%s944 + $0x18] sm:$0xff]
        %v949 = vld [vmem:[%s944 + $0x20] sm:$0xff]
        %v950 = vld [vmem:[%s944 + $0x28] sm:$0xff]
        %v951 = vld [vmem:[%s944 + $0x30] sm:$0xff]
        %v952 = vld [vmem:[%s944 + $0x38] sm:$0xff]
        %v953 = vld [vmem:[%s944 + $0x40] sm:$0xff]
        %v954 = vld [vmem:[%s944 + $0x48] sm:$0xff]
        %v955 = vld [vmem:[%s944 + $0x50] sm:$0xff]
        %v956 = vld [vmem:[%s944 + $0x58] sm:$0xff]
        %v957 = vld [vmem:[%s944 + $0x60] sm:$0xff]
        %v958 = vld [vmem:[%s944 + $0x68] sm:$0xff]
        %v959 = vld [vmem:[%s944 + $0x70] sm:$0xff]
        %v960 = vld [vmem:[%s944 + $0x78] sm:$0xff]
        %v961 = vld [vmem:[%s944 + $0x80] sm:$0xff]
        %v962 = vld [vmem:[%s944 + $0x88] sm:$0xff]
        %v963 = vrot.slane %v467, 5
        %v964 = vrot.slane %v468, 5
        %v966 = vsel %vm488, %v964, 0
        %968 = vmatprep.subr.mxu0 0.0
        %969 = vmatpush1.msra.mxu0 %v960
        %970 = vmatprep.subr.mxu0 0.0
        %971 = vmatpush1.msra.mxu0 %v959
        %972 = vmatprep.subr.mxu0 0.0
        %973 = vmatpush1.msra.mxu0 %v958
        %974 = vmatprep.subr.mxu0 0.0
        %975 = vmatpush1.msra.mxu0 %v957
        %976 = vmatprep.subr.mxu0 0.0
        %977 = vmatpush1.msra.mxu0 %v956
        %978 = vmatprep.subr.mxu0 0.0
        %979 = vmatpush1.msra.mxu0 %v955
        %980 = vmatprep.subr.mxu0 0.0
        %981 = vmatpush1.msra.mxu0 %v954
        %982 = vmatprep.subr.mxu0 0.0
        %983 = vmatpush1.msra.mxu0 %v953
        %984 = vmatprep.subr.mxu0 0.0
        %985 = vmatpush1.msra.mxu0 %v952
        %986 = vmatprep.subr.mxu0 0.0
        %987 = vmatpush1.msra.mxu0 %v951
        %988 = vmatprep.subr.mxu0 0.0
        %989 = vmatpush1.msra.mxu0 %v950
        %990 = vmatprep.subr.mxu0 0.0
        %991 = vmatpush1.msra.mxu0 %v949
        %992 = vmatprep.subr.mxu0 0.0
        %993 = vmatpush1.msra.mxu0 %v948
        %994 = vmatprep.subr.mxu0 0.0
        %995 = vmatpush1.msra.mxu0 %v947
        %996 = vmatprep.subr.mxu0 0.0
        %997 = vmatpush1.msra.mxu0 %v946
        %998 = vmatprep.subr.mxu0 0.0
        %999 = vmatpush1.msra.mxu0 %v945
        %1000 = vmatprep.subr.mxu0 0.0
        %1001 = vmatpush2.msra.mxu0 0.0
        %1002 = vmatprep.subr.mxu0 0.0
        %1003 = vmatpush2.msra.mxu0 0.0
        %1004 = vmatprep.subr.mxu0 0.0
        %1005 = vmatpush2.msra.mxu0 0.0
        %1006 = vmatprep.subr.mxu0 0.0
        %1007 = vmatpush2.msra.mxu0 0.0
        %1008 = vmatprep.subr.mxu0 0.0
        %1009 = vmatpush2.msra.mxu0 0.0
        %1010 = vmatprep.subr.mxu0 0.0
        %1011 = vmatpush2.msra.mxu0 0.0
        %1012 = vmatprep.subr.mxu0 0.0
        %1013 = vmatpush2.msra.mxu0 0.0
        %1014 = vmatprep.subr.mxu0 0.0
        %1015 = vmatpush2.msra.mxu0 0.0
        %1016 = vmatprep.subr.mxu0 0.0
        %1017 = vmatpush2.msra.mxu0 0.0
        %1018 = vmatprep.subr.mxu0 0.0
        %1019 = vmatpush2.msra.mxu0 0.0
        %1020 = vmatprep.subr.mxu0 0.0
        %1021 = vmatpush2.msra.mxu0 0.0
        %1022 = vmatprep.subr.mxu0 0.0
        %1023 = vmatpush2.msra.mxu0 0.0
        %1024 = vmatprep.subr.mxu0 0.0
        %1025 = vmatpush2.msra.mxu0 0.0
        %1026 = vmatprep.subr.mxu0 0.0
        %1027 = vmatpush2.msra.mxu0 0.0
        %1028 = vmatprep.subr.mxu0 0.0
        %1029 = vmatpush2.msra.mxu0 %v962
        %1030 = vmatprep.subr.mxu0 0.0
        %1031 = vmatpush2.msra.mxu0 %v961
        %1032 = vmatprep.mubr.f32.mxu0 %v966
        %1033 = vmatmul.mubr.f32.gmra.mxu0 %v963
        %v1034 = vpop.f32.mrf.mxu0
        %v1035 = vadd.f32 0.0, %v1034
        %v1036 = vpop.f32.mrf.mxu0
        %1037 = vdwg.mxu0
        %v1038 = vadd.f32 %v943, %v1035
        %s1039 = scalar_lea.vmem %s4, 864
        %v1040 = vld [vmem:[%s1039] sm:$0xff]
        %v1041 = vld [vmem:[%s1039 + $0x8] sm:$0xff]
        %v1042 = vld [vmem:[%s1039 + $0x10] sm:$0xff]
        %v1043 = vld [vmem:[%s1039 + $0x18] sm:$0xff]
        %v1044 = vld [vmem:[%s1039 + $0x20] sm:$0xff]
        %v1045 = vld [vmem:[%s1039 + $0x28] sm:$0xff]
        %v1046 = vld [vmem:[%s1039 + $0x30] sm:$0xff]
        %v1047 = vld [vmem:[%s1039 + $0x38] sm:$0xff]
        %v1048 = vld [vmem:[%s1039 + $0x40] sm:$0xff]
        %v1049 = vld [vmem:[%s1039 + $0x48] sm:$0xff]
        %v1050 = vld [vmem:[%s1039 + $0x50] sm:$0xff]
        %v1051 = vld [vmem:[%s1039 + $0x58] sm:$0xff]
        %v1052 = vld [vmem:[%s1039 + $0x60] sm:$0xff]
        %v1053 = vld [vmem:[%s1039 + $0x68] sm:$0xff]
        %v1054 = vld [vmem:[%s1039 + $0x70] sm:$0xff]
        %v1055 = vld [vmem:[%s1039 + $0x78] sm:$0xff]
        %v1056 = vld [vmem:[%s1039 + $0x80] sm:$0xff]
        %v1057 = vld [vmem:[%s1039 + $0x88] sm:$0xff]
        %v1058 = vrot.slane %v467, 6
        %v1059 = vrot.slane %v468, 6
        %v1061 = vsel %vm488, %v1059, 0
        %1063 = vmatprep.subr.mxu0 0.0
        %1064 = vmatpush1.msra.mxu0 %v1055
        %1065 = vmatprep.subr.mxu0 0.0
        %1066 = vmatpush1.msra.mxu0 %v1054
        %1067 = vmatprep.subr.mxu0 0.0
        %1068 = vmatpush1.msra.mxu0 %v1053
        %1069 = vmatprep.subr.mxu0 0.0
        %1070 = vmatpush1.msra.mxu0 %v1052
        %1071 = vmatprep.subr.mxu0 0.0
        %1072 = vmatpush1.msra.mxu0 %v1051
        %1073 = vmatprep.subr.mxu0 0.0
        %1074 = vmatpush1.msra.mxu0 %v1050
        %1075 = vmatprep.subr.mxu0 0.0
        %1076 = vmatpush1.msra.mxu0 %v1049
        %1077 = vmatprep.subr.mxu0 0.0
        %1078 = vmatpush1.msra.mxu0 %v1048
        %1079 = vmatprep.subr.mxu0 0.0
        %1080 = vmatpush1.msra.mxu0 %v1047
        %1081 = vmatprep.subr.mxu0 0.0
        %1082 = vmatpush1.msra.mxu0 %v1046
        %1083 = vmatprep.subr.mxu0 0.0
        %1084 = vmatpush1.msra.mxu0 %v1045
        %1085 = vmatprep.subr.mxu0 0.0
        %1086 = vmatpush1.msra.mxu0 %v1044
        %1087 = vmatprep.subr.mxu0 0.0
        %1088 = vmatpush1.msra.mxu0 %v1043
        %1089 = vmatprep.subr.mxu0 0.0
        %1090 = vmatpush1.msra.mxu0 %v1042
        %1091 = vmatprep.subr.mxu0 0.0
        %1092 = vmatpush1.msra.mxu0 %v1041
        %1093 = vmatprep.subr.mxu0 0.0
        %1094 = vmatpush1.msra.mxu0 %v1040
        %1095 = vmatprep.subr.mxu0 0.0
        %1096 = vmatpush2.msra.mxu0 0.0
        %1097 = vmatprep.subr.mxu0 0.0
        %1098 = vmatpush2.msra.mxu0 0.0
        %1099 = vmatprep.subr.mxu0 0.0
        %1100 = vmatpush2.msra.mxu0 0.0
        %1101 = vmatprep.subr.mxu0 0.0
        %1102 = vmatpush2.msra.mxu0 0.0
        %1103 = vmatprep.subr.mxu0 0.0
        %1104 = vmatpush2.msra.mxu0 0.0
        %1105 = vmatprep.subr.mxu0 0.0
        %1106 = vmatpush2.msra.mxu0 0.0
        %1107 = vmatprep.subr.mxu0 0.0
        %1108 = vmatpush2.msra.mxu0 0.0
        %1109 = vmatprep.subr.mxu0 0.0
        %1110 = vmatpush2.msra.mxu0 0.0
        %1111 = vmatprep.subr.mxu0 0.0
        %1112 = vmatpush2.msra.mxu0 0.0
        %1113 = vmatprep.subr.mxu0 0.0
        %1114 = vmatpush2.msra.mxu0 0.0
        %1115 = vmatprep.subr.mxu0 0.0
        %1116 = vmatpush2.msra.mxu0 0.0
        %1117 = vmatprep.subr.mxu0 0.0
        %1118 = vmatpush2.msra.mxu0 0.0
        %1119 = vmatprep.subr.mxu0 0.0
        %1120 = vmatpush2.msra.mxu0 0.0
        %1121 = vmatprep.subr.mxu0 0.0
        %1122 = vmatpush2.msra.mxu0 0.0
        %1123 = vmatprep.subr.mxu0 0.0
        %1124 = vmatpush2.msra.mxu0 %v1057
        %1125 = vmatprep.subr.mxu0 0.0
        %1126 = vmatpush2.msra.mxu0 %v1056
        %1127 = vmatprep.mubr.f32.mxu0 %v1061
        %1128 = vmatmul.mubr.f32.gmra.mxu0 %v1058
        %v1129 = vpop.f32.mrf.mxu0
        %v1130 = vadd.f32 0.0, %v1129
        %v1131 = vpop.f32.mrf.mxu0
        %1132 = vdwg.mxu0
        %v1133 = vadd.f32 %v1038, %v1130
        %s1134 = scalar_lea.vmem %s4, 1008
        %v1135 = vld [vmem:[%s1134] sm:$0xff]
        %v1136 = vld [vmem:[%s1134 + $0x8] sm:$0xff]
        %v1137 = vld [vmem:[%s1134 + $0x10] sm:$0xff]
        %v1138 = vld [vmem:[%s1134 + $0x18] sm:$0xff]
        %v1139 = vld [vmem:[%s1134 + $0x20] sm:$0xff]
        %v1140 = vld [vmem:[%s1134 + $0x28] sm:$0xff]
        %v1141 = vld [vmem:[%s1134 + $0x30] sm:$0xff]
        %v1142 = vld [vmem:[%s1134 + $0x38] sm:$0xff]
        %v1143 = vld [vmem:[%s1134 + $0x40] sm:$0xff]
        %v1144 = vld [vmem:[%s1134 + $0x48] sm:$0xff]
        %v1145 = vld [vmem:[%s1134 + $0x50] sm:$0xff]
        %v1146 = vld [vmem:[%s1134 + $0x58] sm:$0xff]
        %v1147 = vld [vmem:[%s1134 + $0x60] sm:$0xff]
        %v1148 = vld [vmem:[%s1134 + $0x68] sm:$0xff]
        %v1149 = vld [vmem:[%s1134 + $0x70] sm:$0xff]
        %v1150 = vld [vmem:[%s1134 + $0x78] sm:$0xff]
        %v1151 = vld [vmem:[%s1134 + $0x80] sm:$0xff]
        %v1152 = vld [vmem:[%s1134 + $0x88] sm:$0xff]
        %v1153 = vrot.slane %v467, 7
        %v1154 = vrot.slane %v468, 7
        %v1156 = vsel %vm488, %v1154, 0
        %1158 = vmatprep.subr.mxu0 0.0
        %1159 = vmatpush1.msra.mxu0 %v1150
        %1160 = vmatprep.subr.mxu0 0.0
        %1161 = vmatpush1.msra.mxu0 %v1149
        %1162 = vmatprep.subr.mxu0 0.0
        %1163 = vmatpush1.msra.mxu0 %v1148
        %1164 = vmatprep.subr.mxu0 0.0
        %1165 = vmatpush1.msra.mxu0 %v1147
        %1166 = vmatprep.subr.mxu0 0.0
        %1167 = vmatpush1.msra.mxu0 %v1146
        %1168 = vmatprep.subr.mxu0 0.0
        %1169 = vmatpush1.msra.mxu0 %v1145
        %1170 = vmatprep.subr.mxu0 0.0
        %1171 = vmatpush1.msra.mxu0 %v1144
        %1172 = vmatprep.subr.mxu0 0.0
        %1173 = vmatpush1.msra.mxu0 %v1143
        %1174 = vmatprep.subr.mxu0 0.0
        %1175 = vmatpush1.msra.mxu0 %v1142
        %1176 = vmatprep.subr.mxu0 0.0
        %1177 = vmatpush1.msra.mxu0 %v1141
        %1178 = vmatprep.subr.mxu0 0.0
        %1179 = vmatpush1.msra.mxu0 %v1140
        %1180 = vmatprep.subr.mxu0 0.0
        %1181 = vmatpush1.msra.mxu0 %v1139
        %1182 = vmatprep.subr.mxu0 0.0
        %1183 = vmatpush1.msra.mxu0 %v1138
        %1184 = vmatprep.subr.mxu0 0.0
        %1185 = vmatpush1.msra.mxu0 %v1137
        %1186 = vmatprep.subr.mxu0 0.0
        %1187 = vmatpush1.msra.mxu0 %v1136
        %1188 = vmatprep.subr.mxu0 0.0
        %1189 = vmatpush1.msra.mxu0 %v1135
        %1190 = vmatprep.subr.mxu0 0.0
        %1191 = vmatpush2.msra.mxu0 0.0
        %1192 = vmatprep.subr.mxu0 0.0
        %1193 = vmatpush2.msra.mxu0 0.0
        %1194 = vmatprep.subr.mxu0 0.0
        %1195 = vmatpush2.msra.mxu0 0.0
        %1196 = vmatprep.subr.mxu0 0.0
        %1197 = vmatpush2.msra.mxu0 0.0
        %1198 = vmatprep.subr.mxu0 0.0
        %1199 = vmatpush2.msra.mxu0 0.0
        %1200 = vmatprep.subr.mxu0 0.0
        %1201 = vmatpush2.msra.mxu0 0.0
        %1202 = vmatprep.subr.mxu0 0.0
        %1203 = vmatpush2.msra.mxu0 0.0
        %1204 = vmatprep.subr.mxu0 0.0
        %1205 = vmatpush2.msra.mxu0 0.0
        %1206 = vmatprep.subr.mxu0 0.0
        %1207 = vmatpush2.msra.mxu0 0.0
        %1208 = vmatprep.subr.mxu0 0.0
        %1209 = vmatpush2.msra.mxu0 0.0
        %1210 = vmatprep.subr.mxu0 0.0
        %1211 = vmatpush2.msra.mxu0 0.0
        %1212 = vmatprep.subr.mxu0 0.0
        %1213 = vmatpush2.msra.mxu0 0.0
        %1214 = vmatprep.subr.mxu0 0.0
        %1215 = vmatpush2.msra.mxu0 0.0
        %1216 = vmatprep.subr.mxu0 0.0
        %1217 = vmatpush2.msra.mxu0 0.0
        %1218 = vmatprep.subr.mxu0 0.0
        %1219 = vmatpush2.msra.mxu0 %v1152
        %1220 = vmatprep.subr.mxu0 0.0
        %1221 = vmatpush2.msra.mxu0 %v1151
        %1222 = vmatprep.mubr.f32.mxu0 %v1156
        %1223 = vmatmul.mubr.f32.gmra.mxu0 %v1153
        %v1224 = vpop.f32.mrf.mxu0
        %v1225 = vadd.f32 0.0, %v1224
        %v1226 = vpop.f32.mrf.mxu0
        %1227 = vdwg.mxu0
        %v1228 = vadd.f32 %v1133, %v1225
        %v1229 = vld [vmem:[%s6] sm:$0xff]
        %v1230 = vld [vmem:[%s343] sm:$0x1]
        %v1231 = vld [vmem:[%s7] sm:$0xff]
        %vm1232 = vcmask 64512
        %v1234 = vsel %vm1232, %v1230, 0
        %1236 = vmatprep.subr.mxu0 0.0
        %1237 = vmatpush1.msra.mxu0 0.0
        %1238 = vmatprep.subr.mxu0 0.0
        %1239 = vmatpush1.msra.mxu0 0.0
        %1240 = vmatprep.subr.mxu0 0.0
        %1241 = vmatpush1.msra.mxu0 0.0
        %1242 = vmatprep.subr.mxu0 0.0
        %1243 = vmatpush1.msra.mxu0 0.0
        %1244 = vmatprep.subr.mxu0 0.0
        %1245 = vmatpush1.msra.mxu0 0.0
        %1246 = vmatprep.subr.mxu0 0.0
        %1247 = vmatpush1.msra.mxu0 0.0
        %1248 = vmatprep.subr.mxu0 0.0
        %1249 = vmatpush1.msra.mxu0 0.0
        %1250 = vmatprep.subr.mxu0 0.0
        %1251 = vmatpush1.msra.mxu0 0.0
        %1252 = vmatprep.subr.mxu0 0.0
        %1253 = vmatpush1.msra.mxu0 0.0
        %1254 = vmatprep.subr.mxu0 0.0
        %1255 = vmatpush1.msra.mxu0 0.0
        %1256 = vmatprep.subr.mxu0 0.0
        %1257 = vmatpush1.msra.mxu0 0.0
        %1258 = vmatprep.subr.mxu0 0.0
        %1259 = vmatpush1.msra.mxu0 0.0
        %1260 = vmatprep.subr.mxu0 0.0
        %1261 = vmatpush1.msra.mxu0 0.0
        %1262 = vmatprep.subr.mxu0 0.0
        %1263 = vmatpush1.msra.mxu0 0.0
        %1264 = vmatprep.subr.mxu0 0.0
        %1265 = vmatpush1.msra.mxu0 0.0
        %1266 = vmatprep.subr.mxu0 0.0
        %1267 = vmatpush1.msra.mxu0 %v1231
        %1268 = vmatprep.subr.mxu0 0.0
        %1269 = vmatpush2.msra.mxu0 0.0
        %1270 = vmatprep.subr.mxu0 0.0
        %1271 = vmatpush2.msra.mxu0 0.0
        %1272 = vmatprep.subr.mxu0 0.0
        %1273 = vmatpush2.msra.mxu0 0.0
        %1274 = vmatprep.subr.mxu0 0.0
        %1275 = vmatpush2.msra.mxu0 0.0
        %1276 = vmatprep.subr.mxu0 0.0
        %1277 = vmatpush2.msra.mxu0 0.0
        %1278 = vmatprep.subr.mxu0 0.0
        %1279 = vmatpush2.msra.mxu0 0.0
        %1280 = vmatprep.subr.mxu0 0.0
        %1281 = vmatpush2.msra.mxu0 0.0
        %1282 = vmatprep.subr.mxu0 0.0
        %1283 = vmatpush2.msra.mxu0 0.0
        %1284 = vmatprep.subr.mxu0 0.0
        %1285 = vmatpush2.msra.mxu0 0.0
        %1286 = vmatprep.subr.mxu0 0.0
        %1287 = vmatpush2.msra.mxu0 0.0
        %1288 = vmatprep.subr.mxu0 0.0
        %1289 = vmatpush2.msra.mxu0 0.0
        %1290 = vmatprep.subr.mxu0 0.0
        %1291 = vmatpush2.msra.mxu0 0.0
        %1292 = vmatprep.subr.mxu0 0.0
        %1293 = vmatpush2.msra.mxu0 0.0
        %1294 = vmatprep.subr.mxu0 0.0
        %1295 = vmatpush2.msra.mxu0 0.0
        %1296 = vmatprep.subr.mxu0 0.0
        %1297 = vmatpush2.msra.mxu0 0.0
        %1298 = vmatprep.subr.mxu0 0.0
        %1299 = vmatpush2.msra.mxu0 0.0
        %1300 = vmatprep.mubr.f32.mxu0 0.0
        %1301 = vmatmul.mubr.f32.gmra.mxu0 %v1234
        %v1302 = vpop.f32.mrf.mxu0
        %v1303 = vadd.f32 0.0, %v1302
        %v1304 = vpop.f32.mrf.mxu0
        %1305 = vdwg.mxu0
        %v1307 = vsel %vm1232, %v1228, 0
        %1309 = vmatprep.subr.mxu0 0.0
        %1310 = vmatpush1.msra.mxu0 0.0
        %1311 = vmatprep.subr.mxu0 0.0
        %1312 = vmatpush1.msra.mxu0 0.0
        %1313 = vmatprep.subr.mxu0 0.0
        %1314 = vmatpush1.msra.mxu0 0.0
        %1315 = vmatprep.subr.mxu0 0.0
        %1316 = vmatpush1.msra.mxu0 0.0
        %1317 = vmatprep.subr.mxu0 0.0
        %1318 = vmatpush1.msra.mxu0 0.0
        %1319 = vmatprep.subr.mxu0 0.0
        %1320 = vmatpush1.msra.mxu0 0.0
        %1321 = vmatprep.subr.mxu0 0.0
        %1322 = vmatpush1.msra.mxu0 0.0
        %1323 = vmatprep.subr.mxu0 0.0
        %1324 = vmatpush1.msra.mxu0 0.0
        %1325 = vmatprep.subr.mxu0 0.0
        %1326 = vmatpush1.msra.mxu0 0.0
        %1327 = vmatprep.subr.mxu0 0.0
        %1328 = vmatpush1.msra.mxu0 0.0
        %1329 = vmatprep.subr.mxu0 0.0
        %1330 = vmatpush1.msra.mxu0 0.0
        %1331 = vmatprep.subr.mxu0 0.0
        %1332 = vmatpush1.msra.mxu0 0.0
        %1333 = vmatprep.subr.mxu0 0.0
        %1334 = vmatpush1.msra.mxu0 0.0
        %1335 = vmatprep.subr.mxu0 0.0
        %1336 = vmatpush1.msra.mxu0 0.0
        %1337 = vmatprep.subr.mxu0 0.0
        %1338 = vmatpush1.msra.mxu0 0.0
        %1339 = vmatprep.subr.mxu0 0.0
        %1340 = vmatpush1.msra.mxu0 %v1229
        %1341 = vmatprep.subr.mxu0 0.0
        %1342 = vmatpush2.msra.mxu0 0.0
        %1343 = vmatprep.subr.mxu0 0.0
        %1344 = vmatpush2.msra.mxu0 0.0
        %1345 = vmatprep.subr.mxu0 0.0
        %1346 = vmatpush2.msra.mxu0 0.0
        %1347 = vmatprep.subr.mxu0 0.0
        %1348 = vmatpush2.msra.mxu0 0.0
        %1349 = vmatprep.subr.mxu0 0.0
        %1350 = vmatpush2.msra.mxu0 0.0
        %1351 = vmatprep.subr.mxu0 0.0
        %1352 = vmatpush2.msra.mxu0 0.0
        %1353 = vmatprep.subr.mxu0 0.0
        %1354 = vmatpush2.msra.mxu0 0.0
        %1355 = vmatprep.subr.mxu0 0.0
        %1356 = vmatpush2.msra.mxu0 0.0
        %1357 = vmatprep.subr.mxu0 0.0
        %1358 = vmatpush2.msra.mxu0 0.0
        %1359 = vmatprep.subr.mxu0 0.0
        %1360 = vmatpush2.msra.mxu0 0.0
        %1361 = vmatprep.subr.mxu0 0.0
        %1362 = vmatpush2.msra.mxu0 0.0
        %1363 = vmatprep.subr.mxu0 0.0
        %1364 = vmatpush2.msra.mxu0 0.0
        %1365 = vmatprep.subr.mxu0 0.0
        %1366 = vmatpush2.msra.mxu0 0.0
        %1367 = vmatprep.subr.mxu0 0.0
        %1368 = vmatpush2.msra.mxu0 0.0
        %1369 = vmatprep.subr.mxu0 0.0
        %1370 = vmatpush2.msra.mxu0 0.0
        %1371 = vmatprep.subr.mxu0 0.0
        %1372 = vmatpush2.msra.mxu0 0.0
        %1373 = vmatprep.mubr.f32.mxu0 0.0
        %1374 = vmatmul.mubr.f32.gmra.mxu0 %v1307
        %v1375 = vpop.f32.mrf.mxu0
        %v1376 = vadd.f32 %v1303, %v1375
        %v1377 = vpop.f32.mrf.mxu0
        %1378 = vdwg.mxu0
        %v1379 = vld [vmem:[%s8] sm:$0x1]
        %v1380 = vadd.f32 %v1376, %v1379
        %v1381 = vmul.f32 %v1380, 0.5
        %v1382 = vmul.f32 %v1380, 0.70710677
        %v1383 = verf.f32.pop %v1382
        %v1384 = vadd.f32 %v1383, 1.0
        %v1385 = vmul.f32 %v1381, %v1384
        %vm1386 = vcmask 57344
        %1387 = vst.msk [vmem:[%s335] sm:$0x1] %vm1386, %v1385
        %s1388 = sand.u32 %s230, 1
        %s1389 = scalar_lea.sflag [#allocation3], %s1388
        %s1390 = sand.u32 %s230, 1
        %s1391 = scalar_lea.vmem [#allocation2], %s1390
        // Predicated region
        $region57: #{ladder_stochastic_forward.1} parent=55 // pred_check
          %p1392 = pneg %p240
        $region58: #{ladder_stochastic_forward.1} parent=55 // pred_check_branch
          %1394 = sbr.rel (%p1392) target = $region60
        $region59: #{ladder_stochastic_forward.1} parent=55 // pred_region
          %s1396 = ssub.s32 16, 16
          %1397 = vsyncadd %s1389, %s1396
          %s1398 = smul.addr %s23, 16
          %s1399 = scalar_lea.hbm %s9, %s1398
          %s1401 = sshll.u32 %s1391, 4
          %s1402 = int_to_ptr.vmem [resolvable:$true] %s1401
          %1404 = dma.vmem_to_hbm [thread:$0]  %s1402, 16, %s1399, %s1389
        $region60: #{ladder_stochastic_forward.1} parent=55 // pred_fallthru
          _
      $region56: #{ladder_stochastic_forward.1} parent=5 // pred_fallthru
        _
      %p1405 = scmp.le.s32.totalorder 2, %s18
      // Predicated region
      $region61: #{ladder_stochastic_forward.1} parent=5 // pred_check
        %p1406 = pneg %p1405
      $region62: #{ladder_stochastic_forward.1} parent=5 // pred_check_branch
        %1408 = sbr.rel (%p1406) target = $region64
      $region63: #{ladder_stochastic_forward.1} parent=5 // pred_region
        %s1409 = ssub.s32 %s18, 2
        // Predicated region
        $region65: #{ladder_stochastic_forward.1} parent=63 // pred_check
          %p1410 = pneg %p246
        $region66: #{ladder_stochastic_forward.1} parent=63 // pred_check_branch
          %1412 = sbr.rel (%p1410) target = $region68
        $region67: #{ladder_stochastic_forward.1} parent=63 // pred_region
          %s1413 = sand.u32 %s231, 1
          %s1414 = scalar_lea.sflag [#allocation3], %s1413
          %s1415 = sand.u32 %s231, 1
          %s1416 = scalar_lea.vmem [#allocation2], %s1415
          %1417 = dma.done %s1414, 16
        $region68: #{ladder_stochastic_forward.1} parent=63 // pred_fallthru
          _
      $region64: #{ladder_stochastic_forward.1} parent=5 // pred_fallthru
        _
    $region6: #{ladder_stochastic_forward.1} parent=1 // loop_footer
      %s22 = sadd.s32 1, %s18
    $region7: #{ladder_stochastic_forward.1} parent=1 // loop_footer_branch
      %17 = sbr.rel target = $region3
    $region8: #{ladder_stochastic_forward.1} parent=1 // loop_exit
      _
    %1418 = vsyncpa [#allocation3], 1
    %s1419 = scalar_lea.sflag [#allocation3], 1
    %1420 = vsyncpa %s1419, 1

</llo_original>
